<compile_context>
chip_gen: v5e
topology: v5e:2x2
jax: 0.10.0
libtpu: 0.0.40
codegen_flags: <defaults>
</compile_context>

<pallas_src>
import functools

import jax
import jax.numpy as jnp
import numpy as np
from jax.experimental import pallas as pl
from jax.experimental.pallas import tpu as pltpu

EPS = 1e-5  # BatchNorm1d default eps
K = 3       # Conv1d kernel size used by every block


# ----------------------------------------------------------------------------
# Fused Pallas kernel (built per static shape configuration)
# ----------------------------------------------------------------------------
def _make_forward_kernel(block_dims, lp_last):
    """block_dims: tuple of (L_in, L_conv, Cin, Cout) per conv block (static)."""
    nb = len(block_dims)

    def kernel(*refs):
        x_ref = refs[0]                                  # [L, 1] per-sample input
        conv_refs = refs[1:1 + 2 * nb]                   # per block: w [K,Cin,Cout], shift [1,Cout]
        w1r_ref, b1_ref, w2_ref, b2_ref = refs[1 + 2 * nb:5 + 2 * nb]
        o_ref = refs[5 + 2 * nb]                         # [1, num_classes]
        scratch = refs[6 + 2 * nb:]                      # per-block pre-pool activations (VMEM)

        # ---- block 0: Conv1d(Cin=1, K=3) as 3 shifted VPU multiply-accumulates ----
        _, lc0, _, _ = block_dims[0]
        w0_ref, s0_ref = conv_refs[0], conv_refs[1]
        acc = x_ref[0:lc0, :] * w0_ref[0]                # [lc0,1] * [1,Cout] broadcast
        for k in range(1, K):
            acc = acc + x_ref[k:k + lc0, :] * w0_ref[k]
        scratch[0][...] = jnp.maximum(acc + s0_ref[...], 0.0)   # BN shift + ReLU

        # ---- blocks 1..nb-1: MaxPool(2,2) of the previous block fused into the
        #      conv's im2col reads (stride-2 loads) + one MXU matmul per tap ----
        for b in range(1, nb):
            _, lc, _, _ = block_dims[b]
            wb_ref, sb_ref = conv_refs[2 * b], conv_refs[2 * b + 1]
            prev = scratch[b - 1]
            acc = None
            for k in range(K):
                # pooled_input[l + k] = max(prev[2(l+k)], prev[2(l+k)+1])
                a_k = jnp.maximum(prev[pl.ds(2 * k, lc, 2), :],
                                  prev[pl.ds(2 * k + 1, lc, 2), :])
                t = jnp.dot(a_k, wb_ref[k], preferred_element_type=jnp.float32)
                acc = t if acc is None else acc + t
            scratch[b][...] = jnp.maximum(acc + sb_ref[...], 0.0)

        # ---- final MaxPool + (channel-major flatten folded into w1r) + MLP head ----
        last = scratch[nb - 1]
        h = b1_ref[...]                                  # [1, 128]
        for l in range(lp_last):
            a_l = jnp.maximum(last[pl.ds(2 * l, 1), :],
                              last[pl.ds(2 * l + 1, 1), :])
            h = h + jnp.dot(a_l, w1r_ref[l], preferred_element_type=jnp.float32)
        h = jnp.maximum(h, 0.0)                          # fc ReLU (Dropout: identity in eval)
        o_ref[...] = (jnp.dot(h, w2_ref[...], preferred_element_type=jnp.float32)
                      + b2_ref[...])

    return kernel


# ----------------------------------------------------------------------------
# Forward wrapper (mirrors CNN_1D.forward; dataset in ('PU','SV') -> uses C8)
# ----------------------------------------------------------------------------
def cnn_1d_forward(x, params, dataset="PU"):
    """x: [N, L, 1, 1] (TPPI input; L = spectral channels). Returns [N, classes]."""
    xs = jnp.squeeze(x, axis=2).astype(jnp.float32)      # [N, L, Cin=1] channels-last
    N, L, _ = xs.shape
    block_keys = ["C2", "C4", "C6"] + (["C8"] if dataset in ("PU", "SV") else [])

    conv_args, conv_specs, block_dims = [], [], []
    l_in = L
    for key in block_keys:
        w, bias, gamma, beta, mean, var = params[key]    # w: [Cout, Cin, K] (PyTorch layout)
        cout, cin, kk = w.shape
        inv = gamma / jnp.sqrt(var + EPS)                 # folded eval-mode BN scale
        w_f = (jnp.transpose(w, (2, 1, 0)) * inv).astype(jnp.float32)     # [K, Cin, Cout]
        shift = (beta + (bias - mean) * inv).reshape(1, cout).astype(jnp.float32)
        lc = l_in - (kk - 1)                              # 'valid' conv output length
        block_dims.append((l_in, lc, cin, cout))
        conv_args += [w_f, shift]
        conv_specs += [pl.BlockSpec((kk, cin, cout), lambda n: (0, 0, 0)),
                       pl.BlockSpec((1, cout), lambda n: (0, 0))]
        l_in = lc // 2                                    # MaxPool1d(2,2), floor

    lp_last, c_last = l_in, block_dims[-1][3]

    w1, b1 = params["fc"]
    w2, b2 = params["cls"]
    nh, ncls = w1.shape[1], w2.shape[1]
    # PyTorch flattens [N, C, L] channel-major; fold that permutation into w1 so the
    # kernel contracts position-by-position with no transpose between conv and FC.
    w1r = w1.reshape(c_last, lp_last, nh).transpose(1, 0, 2)              # [Lp, C, 128]
    fc_args = [w1r, b1.reshape(1, nh), w2, b2.reshape(1, ncls)]
    fc_specs = [pl.BlockSpec((lp_last, c_last, nh), lambda n: (0, 0, 0)),
                pl.BlockSpec((1, nh), lambda n: (0, 0)),
                pl.BlockSpec((nh, ncls), lambda n: (0, 0)),
                pl.BlockSpec((1, ncls), lambda n: (0, 0))]

    kernel = _make_forward_kernel(tuple(block_dims), lp_last)

    out = pl.pallas_call(
        kernel,
        grid=(N,),
        in_specs=[pl.BlockSpec((None, L, 1), lambda n: (n, 0, 0))] + conv_specs + fc_specs,
        out_specs=pl.BlockSpec((None, 1, ncls), lambda n: (n, 0, 0)),
        out_shape=jax.ShapeDtypeStruct((N, 1, ncls), jnp.float32),
        scratch_shapes=[pltpu.VMEM((lc, cout), jnp.float32)
                        for (_, lc, _, cout) in block_dims],
        compiler_params=pltpu.CompilerParams(dimension_semantics=("parallel",)),
    )(xs, *conv_args, *fc_args)
    return out.reshape(N, ncls)


# ----------------------------------------------------------------------------
# Pure-JAX reference (same math, no Pallas) for validation
# ----------------------------------------------------------------------------
def _ref_block(x, w, bias, gamma, beta, mean, var):
    N, L, Cin = x.shape
    Cout, _, kk = w.shape
    Lc = L - (kk - 1)
    Lp = Lc // 2
    patches = jnp.concatenate([x[:, k:k + Lc, :] for k in range(kk)], axis=-1)
    wm = jnp.transpose(w, (2, 1, 0)).reshape(kk * Cin, Cout)
    z = patches @ wm + bias
    z = (z - mean) / jnp.sqrt(var + EPS) * gamma + beta
    z = jnp.maximum(z, 0.0)
    return z[:, : 2 * Lp, :].reshape(N, Lp, 2, Cout).max(axis=2)


def _ref_forward(x, params, dataset="PU"):
    a = jnp.squeeze(x, axis=2)
    a = _ref_block(a, *params["C2"])
    a = _ref_block(a, *params["C4"])
    a = _ref_block(a, *params["C6"])
    if dataset in ("PU", "SV"):
        a = _ref_block(a, *params["C8"])
    feat = jnp.transpose(a, (0, 2, 1)).reshape(a.shape[0], -1)   # channel-major flatten
    w1, b1 = params["fc"]
    w2, b2 = params["cls"]
    h = jnp.maximum(feat @ w1 + b1, 0.0)
    return h @ w2 + b2


# ----------------------------------------------------------------------------
# Deterministic synthetic parameters
# ----------------------------------------------------------------------------
def _init_conv_bn(key, cin, cout, k=3):
    kw, kb, kg, kbe, km, kv = jax.random.split(key, 6)
    w = 0.2 * jax.random.normal(kw, (cout, cin, k), jnp.float32)
    b = 0.1 * jax.random.normal(kb, (cout,), jnp.float32)
    gamma = 1.0 + 0.1 * jax.random.normal(kg, (cout,), jnp.float32)
    beta = 0.1 * jax.random.normal(kbe, (cout,), jnp.float32)
    mean = 0.1 * jax.random.normal(km, (cout,), jnp.float32)
    var = 0.9 + 0.1 * jnp.abs(jax.random.normal(kv, (cout,), jnp.float32))
    return (w, b, gamma, beta, mean, var)


def _init_linear(key, fin, fout):
    kw, kb = jax.random.split(key)
    w = jax.random.normal(kw, (fin, fout), jnp.float32) / np.sqrt(fin)
    b = 0.1 * jax.random.normal(kb, (fout,), jnp.float32)
    return (w, b)


if __name__ == "__main__":
    DATASET = "PU"        # in ('PU','SV') -> C8 block is used
    NUM_CLASSES = 9       # get_class_num('PU')
    N, L = 4, 64          # small synthetic: batch=4, spectral channels=64

    # spatial sizes through the 4 blocks: (l - 2) // 2 each
    l = L
    for _ in range(4):
        l = (l - 2) // 2
    fc_in = 48 * l        # get_fc_in(dataset, 'CNN_1D') analogue

    root = jax.random.PRNGKey(0)
    kx, k2, k4, k6, k8, kfc, kcls = jax.random.split(root, 7)
    params = {
        "C2": _init_conv_bn(k2, 1, 6),
        "C4": _init_conv_bn(k4, 6, 12),
        "C6": _init_conv_bn(k6, 12, 24),
        "C8": _init_conv_bn(k8, 24, 48),
        "fc": _init_linear(kfc, fc_in, 128),
        "cls": _init_linear(kcls, 128, NUM_CLASSES),
    }
    # TODO(synk): Dropout (p=0.1 / p=0.4) and BatchNorm running-stat updates are
    # training-only; this implements eval-mode forward semantics.

    x = jax.random.normal(kx, (N, L, 1, 1), jnp.float32)

    fwd = jax.jit(functools.partial(cnn_1d_forward, dataset=DATASET))
    out = jax.block_until_ready(fwd(x, params))
    ref = jax.block_until_ready(_ref_forward(x, params, DATASET))

    assert out.shape == (N, NUM_CLASSES)
    np.testing.assert_allclose(np.asarray(out), np.asarray(ref), rtol=1e-4, atol=1e-4)
    print("KERNEL_OK")
</pallas_src>

<mosaic_0001>
module attributes {stable_mosaic.version = 11 : i64} {
  func.func @kernel(%arg0: i32, %arg1: memref<1x64x1xf32, #tpu.memory_space<vmem>>, %arg2: memref<3x1x6xf32, #tpu.memory_space<vmem>>, %arg3: memref<1x6xf32, #tpu.memory_space<vmem>>, %arg4: memref<3x6x12xf32, #tpu.memory_space<vmem>>, %arg5: memref<1x12xf32, #tpu.memory_space<vmem>>, %arg6: memref<3x12x24xf32, #tpu.memory_space<vmem>>, %arg7: memref<1x24xf32, #tpu.memory_space<vmem>>, %arg8: memref<3x24x48xf32, #tpu.memory_space<vmem>>, %arg9: memref<1x48xf32, #tpu.memory_space<vmem>>, %arg10: memref<2x48x128xf32, #tpu.memory_space<vmem>>, %arg11: memref<1x128xf32, #tpu.memory_space<vmem>>, %arg12: memref<128x9xf32, #tpu.memory_space<vmem>>, %arg13: memref<1x9xf32, #tpu.memory_space<vmem>>, %arg14: memref<1x1x9xf32, #tpu.memory_space<vmem>>, %arg15: memref<62x6xf32, #tpu.memory_space<vmem>>, %arg16: memref<29x12xf32, #tpu.memory_space<vmem>>, %arg17: memref<12x24xf32, #tpu.memory_space<vmem>>, %arg18: memref<4x48xf32, #tpu.memory_space<vmem>>) attributes {dimension_semantics = [#tpu.dimension_semantics<parallel>], iteration_bounds = array<i64: 4>, scalar_prefetch = 0 : i64, scratch_operands = 4 : i64, tpu.core_type = #tpu.core_type<tc>, window_params = [{transform_indices = @transform_0, window_bounds = array<i64: 1, 64, 1>}, {pipeline_mode = #tpu.pipeline_mode<synchronous>, transform_indices = @transform_1, window_bounds = array<i64: 3, 1, 6>}, {pipeline_mode = #tpu.pipeline_mode<synchronous>, transform_indices = @transform_2, window_bounds = array<i64: 1, 6>}, {pipeline_mode = #tpu.pipeline_mode<synchronous>, transform_indices = @transform_3, window_bounds = array<i64: 3, 6, 12>}, {pipeline_mode = #tpu.pipeline_mode<synchronous>, transform_indices = @transform_4, window_bounds = array<i64: 1, 12>}, {pipeline_mode = #tpu.pipeline_mode<synchronous>, transform_indices = @transform_5, window_bounds = array<i64: 3, 12, 24>}, {pipeline_mode = #tpu.pipeline_mode<synchronous>, transform_indices = @transform_6, window_bounds = array<i64: 1, 24>}, {pipeline_mode = #tpu.pipeline_mode<synchronous>, transform_indices = @transform_7, window_bounds = array<i64: 3, 24, 48>}, {pipeline_mode = #tpu.pipeline_mode<synchronous>, transform_indices = @transform_8, window_bounds = array<i64: 1, 48>}, {pipeline_mode = #tpu.pipeline_mode<synchronous>, transform_indices = @transform_9, window_bounds = array<i64: 2, 48, 128>}, {pipeline_mode = #tpu.pipeline_mode<synchronous>, transform_indices = @transform_10, window_bounds = array<i64: 1, 128>}, {pipeline_mode = #tpu.pipeline_mode<synchronous>, transform_indices = @transform_11, window_bounds = array<i64: 128, 9>}, {pipeline_mode = #tpu.pipeline_mode<synchronous>, transform_indices = @transform_12, window_bounds = array<i64: 1, 9>}, {transform_indices = @transform_13, window_bounds = array<i64: 1, 1, 9>}]} {
    %c0 = arith.constant 0 : index
    %c0_0 = arith.constant 0 : index
    %c0_1 = arith.constant 0 : index
    %0 = vector.load %arg1[%c0, %c0_0, %c0_1] : memref<1x64x1xf32, #tpu.memory_space<vmem>>, vector<1x62x1xf32>
    %1 = vector.shape_cast %0 : vector<1x62x1xf32> to vector<62x1xf32>
    %c0_2 = arith.constant 0 : index
    %c0_3 = arith.constant 0 : index
    %c0_4 = arith.constant 0 : index
    %2 = vector.load %arg2[%c0_2, %c0_3, %c0_4] : memref<3x1x6xf32, #tpu.memory_space<vmem>>, vector<1x1x6xf32>
    %3 = vector.shape_cast %2 : vector<1x1x6xf32> to vector<1x6xf32>
    %4 = vector.broadcast %1 : vector<62x1xf32> to vector<62x6xf32>
    %5 = vector.broadcast %3 : vector<1x6xf32> to vector<62x6xf32>
    %6 = arith.mulf %4, %5 : vector<62x6xf32>
    %c0_5 = arith.constant 0 : index
    %c1 = arith.constant 1 : index
    %c0_6 = arith.constant 0 : index
    %7 = vector.load %arg1[%c0_5, %c1, %c0_6] : memref<1x64x1xf32, #tpu.memory_space<vmem>>, vector<1x62x1xf32>
    %8 = vector.shape_cast %7 : vector<1x62x1xf32> to vector<62x1xf32>
    %c1_7 = arith.constant 1 : index
    %c0_8 = arith.constant 0 : index
    %c0_9 = arith.constant 0 : index
    %9 = vector.load %arg2[%c1_7, %c0_8, %c0_9] : memref<3x1x6xf32, #tpu.memory_space<vmem>>, vector<1x1x6xf32>
    %10 = vector.shape_cast %9 : vector<1x1x6xf32> to vector<1x6xf32>
    %11 = vector.broadcast %8 : vector<62x1xf32> to vector<62x6xf32>
    %12 = vector.broadcast %10 : vector<1x6xf32> to vector<62x6xf32>
    %13 = arith.mulf %11, %12 : vector<62x6xf32>
    %14 = arith.addf %6, %13 : vector<62x6xf32>
    %c0_10 = arith.constant 0 : index
    %c2 = arith.constant 2 : index
    %c0_11 = arith.constant 0 : index
    %15 = vector.load %arg1[%c0_10, %c2, %c0_11] : memref<1x64x1xf32, #tpu.memory_space<vmem>>, vector<1x62x1xf32>
    %16 = vector.shape_cast %15 : vector<1x62x1xf32> to vector<62x1xf32>
    %c2_12 = arith.constant 2 : index
    %c0_13 = arith.constant 0 : index
    %c0_14 = arith.constant 0 : index
    %17 = vector.load %arg2[%c2_12, %c0_13, %c0_14] : memref<3x1x6xf32, #tpu.memory_space<vmem>>, vector<1x1x6xf32>
    %18 = vector.shape_cast %17 : vector<1x1x6xf32> to vector<1x6xf32>
    %19 = vector.broadcast %16 : vector<62x1xf32> to vector<62x6xf32>
    %20 = vector.broadcast %18 : vector<1x6xf32> to vector<62x6xf32>
    %21 = arith.mulf %19, %20 : vector<62x6xf32>
    %22 = arith.addf %14, %21 : vector<62x6xf32>
    %c0_15 = arith.constant 0 : index
    %c0_16 = arith.constant 0 : index
    %23 = vector.load %arg3[%c0_15, %c0_16] : memref<1x6xf32, #tpu.memory_space<vmem>>, vector<1x6xf32>
    %24 = vector.broadcast %23 : vector<1x6xf32> to vector<62x6xf32>
    %25 = arith.addf %22, %24 : vector<62x6xf32>
    %cst = arith.constant 0.000000e+00 : f32
    %26 = vector.broadcast %cst : f32 to vector<62x6xf32>
    %27 = arith.maximumf %25, %26 : vector<62x6xf32>
    %c0_17 = arith.constant 0 : index
    %c0_18 = arith.constant 0 : index
    %28 = vector.load %arg15[%c0_17, %c0_18] : memref<62x6xf32, #tpu.memory_space<vmem>>, vector<62x6xf32>
    tpu.vector_store %arg15[%c0_17, %c0_18], %27 {strides = array<i32>} : memref<62x6xf32, #tpu.memory_space<vmem>>, vector<62x6xf32>,
    %c0_19 = arith.constant 0 : index
    %c0_20 = arith.constant 0 : index
    %29 = tpu.strided_load %arg15[%c0_19, %c0_20] {strides = array<i32: 2, 1>} : memref<62x6xf32, #tpu.memory_space<vmem>>, vector<29x6xf32>
    %c1_21 = arith.constant 1 : index
    %c0_22 = arith.constant 0 : index
    %30 = tpu.strided_load %arg15[%c1_21, %c0_22] {strides = array<i32: 2, 1>} : memref<62x6xf32, #tpu.memory_space<vmem>>, vector<29x6xf32>
    %31 = arith.maximumf %29, %30 : vector<29x6xf32>
    %c0_23 = arith.constant 0 : index
    %c0_24 = arith.constant 0 : index
    %c0_25 = arith.constant 0 : index
    %32 = vector.load %arg4[%c0_23, %c0_24, %c0_25] : memref<3x6x12xf32, #tpu.memory_space<vmem>>, vector<1x6x12xf32>
    %33 = vector.shape_cast %32 : vector<1x6x12xf32> to vector<6x12xf32>
    %cst_26 = arith.constant dense<0.000000e+00> : vector<29x12xf32>
    %34 = tpu.matmul %31, %33, %cst_26 {dimension_numbers = #tpu.dot_dimension_numbers<[1], [0], [0], [1], [0, 0, 1, 1], [], []>} : vector<29x6xf32>, vector<6x12xf32>, vector<29x12xf32> -> vector<29x12xf32>
    %c2_27 = arith.constant 2 : index
    %c0_28 = arith.constant 0 : index
    %35 = tpu.strided_load %arg15[%c2_27, %c0_28] {strides = array<i32: 2, 1>} : memref<62x6xf32, #tpu.memory_space<vmem>>, vector<29x6xf32>
    %c3 = arith.constant 3 : index
    %c0_29 = arith.constant 0 : index
    %36 = tpu.strided_load %arg15[%c3, %c0_29] {strides = array<i32: 2, 1>} : memref<62x6xf32, #tpu.memory_space<vmem>>, vector<29x6xf32>
    %37 = arith.maximumf %35, %36 : vector<29x6xf32>
    %c1_30 = arith.constant 1 : index
    %c0_31 = arith.constant 0 : index
    %c0_32 = arith.constant 0 : index
    %38 = vector.load %arg4[%c1_30, %c0_31, %c0_32] : memref<3x6x12xf32, #tpu.memory_space<vmem>>, vector<1x6x12xf32>
    %39 = vector.shape_cast %38 : vector<1x6x12xf32> to vector<6x12xf32>
    %cst_33 = arith.constant dense<0.000000e+00> : vector<29x12xf32>
    %40 = tpu.matmul %37, %39, %cst_33 {dimension_numbers = #tpu.dot_dimension_numbers<[1], [0], [0], [1], [0, 0, 1, 1], [], []>} : vector<29x6xf32>, vector<6x12xf32>, vector<29x12xf32> -> vector<29x12xf32>
    %41 = arith.addf %34, %40 : vector<29x12xf32>
    %c4 = arith.constant 4 : index
    %c0_34 = arith.constant 0 : index
    %42 = tpu.strided_load %arg15[%c4, %c0_34] {strides = array<i32: 2, 1>} : memref<62x6xf32, #tpu.memory_space<vmem>>, vector<29x6xf32>
    %c5 = arith.constant 5 : index
    %c0_35 = arith.constant 0 : index
    %43 = tpu.strided_load %arg15[%c5, %c0_35] {strides = array<i32: 2, 1>} : memref<62x6xf32, #tpu.memory_space<vmem>>, vector<29x6xf32>
    %44 = arith.maximumf %42, %43 : vector<29x6xf32>
    %c2_36 = arith.constant 2 : index
    %c0_37 = arith.constant 0 : index
    %c0_38 = arith.constant 0 : index
    %45 = vector.load %arg4[%c2_36, %c0_37, %c0_38] : memref<3x6x12xf32, #tpu.memory_space<vmem>>, vector<1x6x12xf32>
    %46 = vector.shape_cast %45 : vector<1x6x12xf32> to vector<6x12xf32>
    %cst_39 = arith.constant dense<0.000000e+00> : vector<29x12xf32>
    %47 = tpu.matmul %44, %46, %cst_39 {dimension_numbers = #tpu.dot_dimension_numbers<[1], [0], [0], [1], [0, 0, 1, 1], [], []>} : vector<29x6xf32>, vector<6x12xf32>, vector<29x12xf32> -> vector<29x12xf32>
    %48 = arith.addf %41, %47 : vector<29x12xf32>
    %c0_40 = arith.constant 0 : index
    %c0_41 = arith.constant 0 : index
    %49 = vector.load %arg5[%c0_40, %c0_41] : memref<1x12xf32, #tpu.memory_space<vmem>>, vector<1x12xf32>
    %50 = vector.broadcast %49 : vector<1x12xf32> to vector<29x12xf32>
    %51 = arith.addf %48, %50 : vector<29x12xf32>
    %cst_42 = arith.constant 0.000000e+00 : f32
    %52 = vector.broadcast %cst_42 : f32 to vector<29x12xf32>
    %53 = arith.maximumf %51, %52 : vector<29x12xf32>
    %c0_43 = arith.constant 0 : index
    %c0_44 = arith.constant 0 : index
    %54 = vector.load %arg16[%c0_43, %c0_44] : memref<29x12xf32, #tpu.memory_space<vmem>>, vector<29x12xf32>
    tpu.vector_store %arg16[%c0_43, %c0_44], %53 {strides = array<i32>} : memref<29x12xf32, #tpu.memory_space<vmem>>, vector<29x12xf32>,
    %c0_45 = arith.constant 0 : index
    %c0_46 = arith.constant 0 : index
    %55 = tpu.strided_load %arg16[%c0_45, %c0_46] {strides = array<i32: 2, 1>} : memref<29x12xf32, #tpu.memory_space<vmem>>, vector<12x12xf32>
    %c1_47 = arith.constant 1 : index
    %c0_48 = arith.constant 0 : index
    %56 = tpu.strided_load %arg16[%c1_47, %c0_48] {strides = array<i32: 2, 1>} : memref<29x12xf32, #tpu.memory_space<vmem>>, vector<12x12xf32>
    %57 = arith.maximumf %55, %56 : vector<12x12xf32>
    %c0_49 = arith.constant 0 : index
    %c0_50 = arith.constant 0 : index
    %c0_51 = arith.constant 0 : index
    %58 = vector.load %arg6[%c0_49, %c0_50, %c0_51] : memref<3x12x24xf32, #tpu.memory_space<vmem>>, vector<1x12x24xf32>
    %59 = vector.shape_cast %58 : vector<1x12x24xf32> to vector<12x24xf32>
    %cst_52 = arith.constant dense<0.000000e+00> : vector<12x24xf32>
    %60 = tpu.matmul %57, %59, %cst_52 {dimension_numbers = #tpu.dot_dimension_numbers<[1], [0], [0], [1], [0, 0, 1, 1], [], []>} : vector<12x12xf32>, vector<12x24xf32>, vector<12x24xf32> -> vector<12x24xf32>
    %c2_53 = arith.constant 2 : index
    %c0_54 = arith.constant 0 : index
    %61 = tpu.strided_load %arg16[%c2_53, %c0_54] {strides = array<i32: 2, 1>} : memref<29x12xf32, #tpu.memory_space<vmem>>, vector<12x12xf32>
    %c3_55 = arith.constant 3 : index
    %c0_56 = arith.constant 0 : index
    %62 = tpu.strided_load %arg16[%c3_55, %c0_56] {strides = array<i32: 2, 1>} : memref<29x12xf32, #tpu.memory_space<vmem>>, vector<12x12xf32>
    %63 = arith.maximumf %61, %62 : vector<12x12xf32>
    %c1_57 = arith.constant 1 : index
    %c0_58 = arith.constant 0 : index
    %c0_59 = arith.constant 0 : index
    %64 = vector.load %arg6[%c1_57, %c0_58, %c0_59] : memref<3x12x24xf32, #tpu.memory_space<vmem>>, vector<1x12x24xf32>
    %65 = vector.shape_cast %64 : vector<1x12x24xf32> to vector<12x24xf32>
    %cst_60 = arith.constant dense<0.000000e+00> : vector<12x24xf32>
    %66 = tpu.matmul %63, %65, %cst_60 {dimension_numbers = #tpu.dot_dimension_numbers<[1], [0], [0], [1], [0, 0, 1, 1], [], []>} : vector<12x12xf32>, vector<12x24xf32>, vector<12x24xf32> -> vector<12x24xf32>
    %67 = arith.addf %60, %66 : vector<12x24xf32>
    %c4_61 = arith.constant 4 : index
    %c0_62 = arith.constant 0 : index
    %68 = tpu.strided_load %arg16[%c4_61, %c0_62] {strides = array<i32: 2, 1>} : memref<29x12xf32, #tpu.memory_space<vmem>>, vector<12x12xf32>
    %c5_63 = arith.constant 5 : index
    %c0_64 = arith.constant 0 : index
    %69 = tpu.strided_load %arg16[%c5_63, %c0_64] {strides = array<i32: 2, 1>} : memref<29x12xf32, #tpu.memory_space<vmem>>, vector<12x12xf32>
    %70 = arith.maximumf %68, %69 : vector<12x12xf32>
    %c2_65 = arith.constant 2 : index
    %c0_66 = arith.constant 0 : index
    %c0_67 = arith.constant 0 : index
    %71 = vector.load %arg6[%c2_65, %c0_66, %c0_67] : memref<3x12x24xf32, #tpu.memory_space<vmem>>, vector<1x12x24xf32>
    %72 = vector.shape_cast %71 : vector<1x12x24xf32> to vector<12x24xf32>
    %cst_68 = arith.constant dense<0.000000e+00> : vector<12x24xf32>
    %73 = tpu.matmul %70, %72, %cst_68 {dimension_numbers = #tpu.dot_dimension_numbers<[1], [0], [0], [1], [0, 0, 1, 1], [], []>} : vector<12x12xf32>, vector<12x24xf32>, vector<12x24xf32> -> vector<12x24xf32>
    %74 = arith.addf %67, %73 : vector<12x24xf32>
    %c0_69 = arith.constant 0 : index
    %c0_70 = arith.constant 0 : index
    %75 = vector.load %arg7[%c0_69, %c0_70] : memref<1x24xf32, #tpu.memory_space<vmem>>, vector<1x24xf32>
    %76 = vector.broadcast %75 : vector<1x24xf32> to vector<12x24xf32>
    %77 = arith.addf %74, %76 : vector<12x24xf32>
    %cst_71 = arith.constant 0.000000e+00 : f32
    %78 = vector.broadcast %cst_71 : f32 to vector<12x24xf32>
    %79 = arith.maximumf %77, %78 : vector<12x24xf32>
    %c0_72 = arith.constant 0 : index
    %c0_73 = arith.constant 0 : index
    %80 = vector.load %arg17[%c0_72, %c0_73] : memref<12x24xf32, #tpu.memory_space<vmem>>, vector<12x24xf32>
    tpu.vector_store %arg17[%c0_72, %c0_73], %79 {strides = array<i32>} : memref<12x24xf32, #tpu.memory_space<vmem>>, vector<12x24xf32>,
    %c0_74 = arith.constant 0 : index
    %c0_75 = arith.constant 0 : index
    %81 = tpu.strided_load %arg17[%c0_74, %c0_75] {strides = array<i32: 2, 1>} : memref<12x24xf32, #tpu.memory_space<vmem>>, vector<4x24xf32>
    %c1_76 = arith.constant 1 : index
    %c0_77 = arith.constant 0 : index
    %82 = tpu.strided_load %arg17[%c1_76, %c0_77] {strides = array<i32: 2, 1>} : memref<12x24xf32, #tpu.memory_space<vmem>>, vector<4x24xf32>
    %83 = arith.maximumf %81, %82 : vector<4x24xf32>
    %c0_78 = arith.constant 0 : index
    %c0_79 = arith.constant 0 : index
    %c0_80 = arith.constant 0 : index
    %84 = vector.load %arg8[%c0_78, %c0_79, %c0_80] : memref<3x24x48xf32, #tpu.memory_space<vmem>>, vector<1x24x48xf32>
    %85 = vector.shape_cast %84 : vector<1x24x48xf32> to vector<24x48xf32>
    %cst_81 = arith.constant dense<0.000000e+00> : vector<4x48xf32>
    %86 = tpu.matmul %83, %85, %cst_81 {dimension_numbers = #tpu.dot_dimension_numbers<[1], [0], [0], [1], [0, 0, 1, 1], [], []>} : vector<4x24xf32>, vector<24x48xf32>, vector<4x48xf32> -> vector<4x48xf32>
    %c2_82 = arith.constant 2 : index
    %c0_83 = arith.constant 0 : index
    %87 = tpu.strided_load %arg17[%c2_82, %c0_83] {strides = array<i32: 2, 1>} : memref<12x24xf32, #tpu.memory_space<vmem>>, vector<4x24xf32>
    %c3_84 = arith.constant 3 : index
    %c0_85 = arith.constant 0 : index
    %88 = tpu.strided_load %arg17[%c3_84, %c0_85] {strides = array<i32: 2, 1>} : memref<12x24xf32, #tpu.memory_space<vmem>>, vector<4x24xf32>
    %89 = arith.maximumf %87, %88 : vector<4x24xf32>
    %c1_86 = arith.constant 1 : index
    %c0_87 = arith.constant 0 : index
    %c0_88 = arith.constant 0 : index
    %90 = vector.load %arg8[%c1_86, %c0_87, %c0_88] : memref<3x24x48xf32, #tpu.memory_space<vmem>>, vector<1x24x48xf32>
    %91 = vector.shape_cast %90 : vector<1x24x48xf32> to vector<24x48xf32>
    %cst_89 = arith.constant dense<0.000000e+00> : vector<4x48xf32>
    %92 = tpu.matmul %89, %91, %cst_89 {dimension_numbers = #tpu.dot_dimension_numbers<[1], [0], [0], [1], [0, 0, 1, 1], [], []>} : vector<4x24xf32>, vector<24x48xf32>, vector<4x48xf32> -> vector<4x48xf32>
    %93 = arith.addf %86, %92 : vector<4x48xf32>
    %c4_90 = arith.constant 4 : index
    %c0_91 = arith.constant 0 : index
    %94 = tpu.strided_load %arg17[%c4_90, %c0_91] {strides = array<i32: 2, 1>} : memref<12x24xf32, #tpu.memory_space<vmem>>, vector<4x24xf32>
    %c5_92 = arith.constant 5 : index
    %c0_93 = arith.constant 0 : index
    %95 = tpu.strided_load %arg17[%c5_92, %c0_93] {strides = array<i32: 2, 1>} : memref<12x24xf32, #tpu.memory_space<vmem>>, vector<4x24xf32>
    %96 = arith.maximumf %94, %95 : vector<4x24xf32>
    %c2_94 = arith.constant 2 : index
    %c0_95 = arith.constant 0 : index
    %c0_96 = arith.constant 0 : index
    %97 = vector.load %arg8[%c2_94, %c0_95, %c0_96] : memref<3x24x48xf32, #tpu.memory_space<vmem>>, vector<1x24x48xf32>
    %98 = vector.shape_cast %97 : vector<1x24x48xf32> to vector<24x48xf32>
    %cst_97 = arith.constant dense<0.000000e+00> : vector<4x48xf32>
    %99 = tpu.matmul %96, %98, %cst_97 {dimension_numbers = #tpu.dot_dimension_numbers<[1], [0], [0], [1], [0, 0, 1, 1], [], []>} : vector<4x24xf32>, vector<24x48xf32>, vector<4x48xf32> -> vector<4x48xf32>
    %100 = arith.addf %93, %99 : vector<4x48xf32>
    %c0_98 = arith.constant 0 : index
    %c0_99 = arith.constant 0 : index
    %101 = vector.load %arg9[%c0_98, %c0_99] : memref<1x48xf32, #tpu.memory_space<vmem>>, vector<1x48xf32>
    %102 = vector.broadcast %101 : vector<1x48xf32> to vector<4x48xf32>
    %103 = arith.addf %100, %102 : vector<4x48xf32>
    %cst_100 = arith.constant 0.000000e+00 : f32
    %104 = vector.broadcast %cst_100 : f32 to vector<4x48xf32>
    %105 = arith.maximumf %103, %104 : vector<4x48xf32>
    %c0_101 = arith.constant 0 : index
    %c0_102 = arith.constant 0 : index
    %106 = vector.load %arg18[%c0_101, %c0_102] : memref<4x48xf32, #tpu.memory_space<vmem>>, vector<4x48xf32>
    tpu.vector_store %arg18[%c0_101, %c0_102], %105 {strides = array<i32>} : memref<4x48xf32, #tpu.memory_space<vmem>>, vector<4x48xf32>,
    %c0_103 = arith.constant 0 : index
    %c0_104 = arith.constant 0 : index
    %107 = vector.load %arg11[%c0_103, %c0_104] : memref<1x128xf32, #tpu.memory_space<vmem>>, vector<1x128xf32>
    %c0_105 = arith.constant 0 : index
    %c0_106 = arith.constant 0 : index
    %108 = vector.load %arg18[%c0_105, %c0_106] : memref<4x48xf32, #tpu.memory_space<vmem>>, vector<1x48xf32>
    %c1_107 = arith.constant 1 : index
    %c0_108 = arith.constant 0 : index
    %109 = vector.load %arg18[%c1_107, %c0_108] : memref<4x48xf32, #tpu.memory_space<vmem>>, vector<1x48xf32>
    %110 = arith.maximumf %108, %109 : vector<1x48xf32>
    %c0_109 = arith.constant 0 : index
    %c0_110 = arith.constant 0 : index
    %c0_111 = arith.constant 0 : index
    %111 = vector.load %arg10[%c0_109, %c0_110, %c0_111] : memref<2x48x128xf32, #tpu.memory_space<vmem>>, vector<1x48x128xf32>
    %112 = vector.shape_cast %111 : vector<1x48x128xf32> to vector<48x128xf32>
    %cst_112 = arith.constant dense<0.000000e+00> : vector<1x128xf32>
    %113 = tpu.matmul %110, %112, %cst_112 {dimension_numbers = #tpu.dot_dimension_numbers<[1], [0], [0], [1], [0, 0, 1, 1], [], []>} : vector<1x48xf32>, vector<48x128xf32>, vector<1x128xf32> -> vector<1x128xf32>
    %114 = arith.addf %107, %113 : vector<1x128xf32>
    %c2_113 = arith.constant 2 : index
    %c0_114 = arith.constant 0 : index
    %115 = vector.load %arg18[%c2_113, %c0_114] : memref<4x48xf32, #tpu.memory_space<vmem>>, vector<1x48xf32>
    %c3_115 = arith.constant 3 : index
    %c0_116 = arith.constant 0 : index
    %116 = vector.load %arg18[%c3_115, %c0_116] : memref<4x48xf32, #tpu.memory_space<vmem>>, vector<1x48xf32>
    %117 = arith.maximumf %115, %116 : vector<1x48xf32>
    %c1_117 = arith.constant 1 : index
    %c0_118 = arith.constant 0 : index
    %c0_119 = arith.constant 0 : index
    %118 = vector.load %arg10[%c1_117, %c0_118, %c0_119] : memref<2x48x128xf32, #tpu.memory_space<vmem>>, vector<1x48x128xf32>
    %119 = vector.shape_cast %118 : vector<1x48x128xf32> to vector<48x128xf32>
    %cst_120 = arith.constant dense<0.000000e+00> : vector<1x128xf32>
    %120 = tpu.matmul %117, %119, %cst_120 {dimension_numbers = #tpu.dot_dimension_numbers<[1], [0], [0], [1], [0, 0, 1, 1], [], []>} : vector<1x48xf32>, vector<48x128xf32>, vector<1x128xf32> -> vector<1x128xf32>
    %121 = arith.addf %114, %120 : vector<1x128xf32>
    %cst_121 = arith.constant 0.000000e+00 : f32
    %122 = vector.broadcast %cst_121 : f32 to vector<1x128xf32>
    %123 = arith.maximumf %121, %122 : vector<1x128xf32>
    %c0_122 = arith.constant 0 : index
    %c0_123 = arith.constant 0 : index
    %124 = vector.load %arg12[%c0_122, %c0_123] : memref<128x9xf32, #tpu.memory_space<vmem>>, vector<128x9xf32>
    %cst_124 = arith.constant dense<0.000000e+00> : vector<1x9xf32>
    %125 = tpu.matmul %123, %124, %cst_124 {dimension_numbers = #tpu.dot_dimension_numbers<[1], [0], [0], [1], [0, 0, 1, 1], [], []>} : vector<1x128xf32>, vector<128x9xf32>, vector<1x9xf32> -> vector<1x9xf32>
    %c0_125 = arith.constant 0 : index
    %c0_126 = arith.constant 0 : index
    %126 = vector.load %arg13[%c0_125, %c0_126] : memref<1x9xf32, #tpu.memory_space<vmem>>, vector<1x9xf32>
    %127 = arith.addf %125, %126 : vector<1x9xf32>
    %c0_127 = arith.constant 0 : index
    %c0_128 = arith.constant 0 : index
    %c0_129 = arith.constant 0 : index
    %128 = vector.load %arg14[%c0_127, %c0_128, %c0_129] : memref<1x1x9xf32, #tpu.memory_space<vmem>>, vector<1x1x9xf32>
    %129 = vector.shape_cast %128 : vector<1x1x9xf32> to vector<1x9xf32>
    %130 = vector.shape_cast %127 : vector<1x9xf32> to vector<1x1x9xf32>
    tpu.vector_store %arg14[%c0_127, %c0_128, %c0_129], %130 {strides = array<i32>} : memref<1x1x9xf32, #tpu.memory_space<vmem>>, vector<1x1x9xf32>,
    return
  }
  func.func @transform_0(%arg0: i32) -> (i32, i32, i32) {
    %c0_i32 = arith.constant 0 : i32
    %c0_i32_0 = arith.constant 0 : i32
    %c0_i32_1 = arith.constant 0 : i32
    return %arg0, %c0_i32, %c0_i32_0 : i32, i32, i32
  }
  func.func @transform_1(%arg0: i32) -> (i32, i32, i32) {
    %c0_i32 = arith.constant 0 : i32
    %c0_i32_0 = arith.constant 0 : i32
    %c0_i32_1 = arith.constant 0 : i32
    %c0_i32_2 = arith.constant 0 : i32
    return %c0_i32, %c0_i32_0, %c0_i32_1 : i32, i32, i32
  }
  func.func @transform_2(%arg0: i32) -> (i32, i32) {
    %c0_i32 = arith.constant 0 : i32
    %c0_i32_0 = arith.constant 0 : i32
    %c0_i32_1 = arith.constant 0 : i32
    return %c0_i32, %c0_i32_0 : i32, i32
  }
  func.func @transform_3(%arg0: i32) -> (i32, i32, i32) {
    %c0_i32 = arith.constant 0 : i32
    %c0_i32_0 = arith.constant 0 : i32
    %c0_i32_1 = arith.constant 0 : i32
    %c0_i32_2 = arith.constant 0 : i32
    return %c0_i32, %c0_i32_0, %c0_i32_1 : i32, i32, i32
  }
  func.func @transform_4(%arg0: i32) -> (i32, i32) {
    %c0_i32 = arith.constant 0 : i32
    %c0_i32_0 = arith.constant 0 : i32
    %c0_i32_1 = arith.constant 0 : i32
    return %c0_i32, %c0_i32_0 : i32, i32
  }
  func.func @transform_5(%arg0: i32) -> (i32, i32, i32) {
    %c0_i32 = arith.constant 0 : i32
    %c0_i32_0 = arith.constant 0 : i32
    %c0_i32_1 = arith.constant 0 : i32
    %c0_i32_2 = arith.constant 0 : i32
    return %c0_i32, %c0_i32_0, %c0_i32_1 : i32, i32, i32
  }
  func.func @transform_6(%arg0: i32) -> (i32, i32) {
    %c0_i32 = arith.constant 0 : i32
    %c0_i32_0 = arith.constant 0 : i32
    %c0_i32_1 = arith.constant 0 : i32
    return %c0_i32, %c0_i32_0 : i32, i32
  }
  func.func @transform_7(%arg0: i32) -> (i32, i32, i32) {
    %c0_i32 = arith.constant 0 : i32
    %c0_i32_0 = arith.constant 0 : i32
    %c0_i32_1 = arith.constant 0 : i32
    %c0_i32_2 = arith.constant 0 : i32
    return %c0_i32, %c0_i32_0, %c0_i32_1 : i32, i32, i32
  }
  func.func @transform_8(%arg0: i32) -> (i32, i32) {
    %c0_i32 = arith.constant 0 : i32
    %c0_i32_0 = arith.constant 0 : i32
    %c0_i32_1 = arith.constant 0 : i32
    return %c0_i32, %c0_i32_0 : i32, i32
  }
  func.func @transform_9(%arg0: i32) -> (i32, i32, i32) {
    %c0_i32 = arith.constant 0 : i32
    %c0_i32_0 = arith.constant 0 : i32
    %c0_i32_1 = arith.constant 0 : i32
    %c0_i32_2 = arith.constant 0 : i32
    return %c0_i32, %c0_i32_0, %c0_i32_1 : i32, i32, i32
  }
  func.func @transform_10(%arg0: i32) -> (i32, i32) {
    %c0_i32 = arith.constant 0 : i32
    %c0_i32_0 = arith.constant 0 : i32
    %c0_i32_1 = arith.constant 0 : i32
    return %c0_i32, %c0_i32_0 : i32, i32
  }
  func.func @transform_11(%arg0: i32) -> (i32, i32) {
    %c0_i32 = arith.constant 0 : i32
    %c0_i32_0 = arith.constant 0 : i32
    %c0_i32_1 = arith.constant 0 : i32
    return %c0_i32, %c0_i32_0 : i32, i32
  }
  func.func @transform_12(%arg0: i32) -> (i32, i32) {
    %c0_i32 = arith.constant 0 : i32
    %c0_i32_0 = arith.constant 0 : i32
    %c0_i32_1 = arith.constant 0 : i32
    return %c0_i32, %c0_i32_0 : i32, i32
  }
  func.func @transform_13(%arg0: i32) -> (i32, i32, i32) {
    %c0_i32 = arith.constant 0 : i32
    %c0_i32_0 = arith.constant 0 : i32
    %c0_i32_1 = arith.constant 0 : i32
    return %arg0, %c0_i32, %c0_i32_0 : i32, i32, i32
  }
}

</mosaic_0001>

<llo_original>
// kernel: cnn_1d_forward.1
$region0: #{cnn_1d_forward.1}
  #allocation0 [shape = 'u32[]', space=smem, size = 0x4, offset = 0x4, fixed_abs, tag = 'smem constant byte address 0x4 - core index']
  #allocation1 [shape = 'u32[72,128]{1,0:T(1,128)}', space=vmem, size = 0x9000, scoped, tag = 'internal scratch']
  #allocation2 [shape = 'f32[62,6]{1,0:T(8,128)}', space=vmem, size = 0x8000, scoped, tag = 'scratch operand']
  #allocation3 [shape = 'f32[29,12]{1,0:T(8,128)}', space=vmem, size = 0x4000, scoped, tag = 'scratch operand']
  #allocation4 [shape = 'f32[12,24]{1,0:T(8,128)}', space=vmem, size = 0x2000, scoped, tag = 'scratch operand']
  #allocation5 [shape = 'f32[4,48]{1,0:T(4,128)}', space=vmem, size = 0x800, scoped, tag = 'scratch operand']
  %s0 = inlined_call_operand.vmem [shape: f32[4,64,1], index: 0, kind: input, shape index: {}]
  %s1 = inlined_call_operand.vmem [shape: f32[3,1,6], index: 1, kind: input, shape index: {}]
  %s2 = inlined_call_operand.vmem [shape: f32[1,6], index: 2, kind: input, shape index: {}]
  %s3 = inlined_call_operand.vmem [shape: f32[3,6,12], index: 3, kind: input, shape index: {}]
  %s4 = inlined_call_operand.vmem [shape: f32[1,12], index: 4, kind: input, shape index: {}]
  %s5 = inlined_call_operand.vmem [shape: f32[3,12,24], index: 5, kind: input, shape index: {}]
  %s6 = inlined_call_operand.vmem [shape: f32[1,24], index: 6, kind: input, shape index: {}]
  %s7 = inlined_call_operand.vmem [shape: f32[3,24,48], index: 7, kind: input, shape index: {}]
  %s8 = inlined_call_operand.vmem [shape: f32[1,48], index: 8, kind: input, shape index: {}]
  %s9 = inlined_call_operand.vmem [shape: f32[2,48,128], index: 9, kind: input, shape index: {}]
  %s10 = inlined_call_operand.vmem [shape: f32[1,128], index: 10, kind: input, shape index: {}]
  %s11 = inlined_call_operand.vmem [shape: f32[128,9], index: 11, kind: input, shape index: {}]
  %s12 = inlined_call_operand.vmem [shape: f32[1,9], index: 12, kind: input, shape index: {}]
  %s13 = inlined_call_operand.hbm [shape: f32[4,1,9], index: 13, kind: output, shape index: {}]
  %s14 = sld [smem:[#allocation0]]
  $region85: #{cnn_1d_forward.1} parent=0
    _
  %s16 = ssub.s32 1, %s14
  %s17 = scalar_select 0, %s16, %s14
  $region1: #{cnn_1d_forward.1} parent=0
    #allocation6 [shape = 'u8[1024]{0}', space=vmem, size = 0x400, scoped, tag = 'output window, operand 0']
    #allocation7 [shape = 's32[2]{0}', space=sflag, size = 0x8, scoped, tag = 'scoped memory for cnn_1d_forward.1']
    %18 = vsyncpa [#allocation7], 0
    %s19 = scalar_lea.sflag [#allocation7], 1
    %20 = vsyncpa %s19, 0
    loop: start=0, step=1, limit=6
    $region2: #{cnn_1d_forward.1} parent=1 // loop_pre_header
      _
    $region3: #{cnn_1d_forward.1} parent=1 // loop_header
      %s22 = sphi 0, %s26
      %p23 = scmp.ge.s32.totalorder %s22, 6
      %s32 = sphi 0, %s34
      %s35 = sphi 0, %s32
      %s36 = sphi 0, %s35
      %s52 = sphi 0, %s36
      %s56 = sphi 0, %s56
      %s58 = sphi 0, %s56
      %s59 = sphi 0, %s58
      %s73 = sphi 0, %s59
      %s77 = sphi 0, %s77
      %s79 = sphi 0, %s77
      %s80 = sphi 0, %s79
      %s94 = sphi 0, %s80
      %s98 = sphi 0, %s98
      %s100 = sphi 0, %s98
      %s101 = sphi 0, %s100
      %s115 = sphi 0, %s101
      %s119 = sphi 0, %s119
      %s121 = sphi 0, %s119
      %s122 = sphi 0, %s121
      %s136 = sphi 0, %s122
      %s140 = sphi 0, %s140
      %s142 = sphi 0, %s140
      %s143 = sphi 0, %s142
      %s157 = sphi 0, %s143
      %s161 = sphi 0, %s161
      %s163 = sphi 0, %s161
      %s164 = sphi 0, %s163
      %s178 = sphi 0, %s164
      %s182 = sphi 0, %s182
      %s184 = sphi 0, %s182
      %s185 = sphi 0, %s184
      %s199 = sphi 0, %s185
      %s203 = sphi 0, %s203
      %s205 = sphi 0, %s203
      %s206 = sphi 0, %s205
      %s220 = sphi 0, %s206
      %s224 = sphi 0, %s224
      %s226 = sphi 0, %s224
      %s227 = sphi 0, %s226
      %s241 = sphi 0, %s227
      %s245 = sphi 0, %s245
      %s247 = sphi 0, %s245
      %s248 = sphi 0, %s247
      %s262 = sphi 0, %s248
      %s266 = sphi 0, %s266
      %s268 = sphi 0, %s266
      %s269 = sphi 0, %s268
      %s283 = sphi 0, %s269
      %s287 = sphi 0, %s287
      %s289 = sphi 0, %s287
      %s290 = sphi 0, %s289
      %s304 = sphi 0, %s290
      %s310 = sphi 0, %s312
      %s313 = sphi 0, %s310
      %s314 = sphi 0, %s313
      %s330 = sphi 0, %s314
    $region4: #{cnn_1d_forward.1} parent=1 // loop_header_branch
      %25 = sbr.rel (%p23) target = $region8
    $region5: #{cnn_1d_forward.1} parent=1 // loop_body
      %s27 = ssub.s32 %s22, 1
      %s28 = ssub.s32 %s22, 2
      %s29 = sadd.s32 %s22, 1
      %s30 = ssub.s32 %s22, %s29
      %p31 = scmp.eq.s32.totalorder %s30, 0
      %s33 = sadd.s32 %s32, 1
      %s34 = scalar_select %p31, %s32, %s33
      %p37 = pneg %p31
      %p38 = scmp.eq.s32.totalorder %s22, 3
      %p39 = por %p37, %p38
      %p40 = scmp.ne.s32.totalorder %s32, %s35
      %p41 = scmp.eq.s32.totalorder %s22, 0
      %p42 = por %p40, %p41
      %p43 = scmp.ne.s32.totalorder %s32, %s35
      %p44 = scmp.eq.s32.totalorder %s27, 3
      %p45 = por %p43, %p44
      %p46 = scmp.ne.s32.totalorder %s35, %s36
      %p47 = scmp.eq.s32.totalorder %s27, 0
      %p48 = por %p46, %p47
      %p49 = scmp.ne.s32.totalorder %s35, %s36
      %p50 = scmp.eq.s32.totalorder %s28, 3
      %p51 = por %p49, %p50
      %p53 = scmp.ne.s32.totalorder %s36, %s52
      %p54 = scmp.eq.s32.totalorder %s28, 0
      %p55 = por %p53, %p54
      %s57 = sadd.s32 %s56, 1
      %p60 = scmp.eq.s32.totalorder %s22, 3
      %p61 = scmp.ne.s32.totalorder %s56, %s58
      %p62 = scmp.eq.s32.totalorder %s22, 0
      %p63 = por %p61, %p62
      %p64 = scmp.ne.s32.totalorder %s56, %s58
      %p65 = scmp.eq.s32.totalorder %s27, 3
      %p66 = por %p64, %p65
      %p67 = scmp.ne.s32.totalorder %s58, %s59
      %p68 = scmp.eq.s32.totalorder %s27, 0
      %p69 = por %p67, %p68
      %p70 = scmp.ne.s32.totalorder %s58, %s59
      %p71 = scmp.eq.s32.totalorder %s28, 3
      %p72 = por %p70, %p71
      %p74 = scmp.ne.s32.totalorder %s59, %s73
      %p75 = scmp.eq.s32.totalorder %s28, 0
      %p76 = por %p74, %p75
      %s78 = sadd.s32 %s77, 1
      %p81 = scmp.eq.s32.totalorder %s22, 3
      %p82 = scmp.ne.s32.totalorder %s77, %s79
      %p83 = scmp.eq.s32.totalorder %s22, 0
      %p84 = por %p82, %p83
      %p85 = scmp.ne.s32.totalorder %s77, %s79
      %p86 = scmp.eq.s32.totalorder %s27, 3
      %p87 = por %p85, %p86
      %p88 = scmp.ne.s32.totalorder %s79, %s80
      %p89 = scmp.eq.s32.totalorder %s27, 0
      %p90 = por %p88, %p89
      %p91 = scmp.ne.s32.totalorder %s79, %s80
      %p92 = scmp.eq.s32.totalorder %s28, 3
      %p93 = por %p91, %p92
      %p95 = scmp.ne.s32.totalorder %s80, %s94
      %p96 = scmp.eq.s32.totalorder %s28, 0
      %p97 = por %p95, %p96
      %s99 = sadd.s32 %s98, 1
      %p102 = scmp.eq.s32.totalorder %s22, 3
      %p103 = scmp.ne.s32.totalorder %s98, %s100
      %p104 = scmp.eq.s32.totalorder %s22, 0
      %p105 = por %p103, %p104
      %p106 = scmp.ne.s32.totalorder %s98, %s100
      %p107 = scmp.eq.s32.totalorder %s27, 3
      %p108 = por %p106, %p107
      %p109 = scmp.ne.s32.totalorder %s100, %s101
      %p110 = scmp.eq.s32.totalorder %s27, 0
      %p111 = por %p109, %p110
      %p112 = scmp.ne.s32.totalorder %s100, %s101
      %p113 = scmp.eq.s32.totalorder %s28, 3
      %p114 = por %p112, %p113
      %p116 = scmp.ne.s32.totalorder %s101, %s115
      %p117 = scmp.eq.s32.totalorder %s28, 0
      %p118 = por %p116, %p117
      %s120 = sadd.s32 %s119, 1
      %p123 = scmp.eq.s32.totalorder %s22, 3
      %p124 = scmp.ne.s32.totalorder %s119, %s121
      %p125 = scmp.eq.s32.totalorder %s22, 0
      %p126 = por %p124, %p125
      %p127 = scmp.ne.s32.totalorder %s119, %s121
      %p128 = scmp.eq.s32.totalorder %s27, 3
      %p129 = por %p127, %p128
      %p130 = scmp.ne.s32.totalorder %s121, %s122
      %p131 = scmp.eq.s32.totalorder %s27, 0
      %p132 = por %p130, %p131
      %p133 = scmp.ne.s32.totalorder %s121, %s122
      %p134 = scmp.eq.s32.totalorder %s28, 3
      %p135 = por %p133, %p134
      %p137 = scmp.ne.s32.totalorder %s122, %s136
      %p138 = scmp.eq.s32.totalorder %s28, 0
      %p139 = por %p137, %p138
      %s141 = sadd.s32 %s140, 1
      %p144 = scmp.eq.s32.totalorder %s22, 3
      %p145 = scmp.ne.s32.totalorder %s140, %s142
      %p146 = scmp.eq.s32.totalorder %s22, 0
      %p147 = por %p145, %p146
      %p148 = scmp.ne.s32.totalorder %s140, %s142
      %p149 = scmp.eq.s32.totalorder %s27, 3
      %p150 = por %p148, %p149
      %p151 = scmp.ne.s32.totalorder %s142, %s143
      %p152 = scmp.eq.s32.totalorder %s27, 0
      %p153 = por %p151, %p152
      %p154 = scmp.ne.s32.totalorder %s142, %s143
      %p155 = scmp.eq.s32.totalorder %s28, 3
      %p156 = por %p154, %p155
      %p158 = scmp.ne.s32.totalorder %s143, %s157
      %p159 = scmp.eq.s32.totalorder %s28, 0
      %p160 = por %p158, %p159
      %s162 = sadd.s32 %s161, 1
      %p165 = scmp.eq.s32.totalorder %s22, 3
      %p166 = scmp.ne.s32.totalorder %s161, %s163
      %p167 = scmp.eq.s32.totalorder %s22, 0
      %p168 = por %p166, %p167
      %p169 = scmp.ne.s32.totalorder %s161, %s163
      %p170 = scmp.eq.s32.totalorder %s27, 3
      %p171 = por %p169, %p170
      %p172 = scmp.ne.s32.totalorder %s163, %s164
      %p173 = scmp.eq.s32.totalorder %s27, 0
      %p174 = por %p172, %p173
      %p175 = scmp.ne.s32.totalorder %s163, %s164
      %p176 = scmp.eq.s32.totalorder %s28, 3
      %p177 = por %p175, %p176
      %p179 = scmp.ne.s32.totalorder %s164, %s178
      %p180 = scmp.eq.s32.totalorder %s28, 0
      %p181 = por %p179, %p180
      %s183 = sadd.s32 %s182, 1
      %p186 = scmp.eq.s32.totalorder %s22, 3
      %p187 = scmp.ne.s32.totalorder %s182, %s184
      %p188 = scmp.eq.s32.totalorder %s22, 0
      %p189 = por %p187, %p188
      %p190 = scmp.ne.s32.totalorder %s182, %s184
      %p191 = scmp.eq.s32.totalorder %s27, 3
      %p192 = por %p190, %p191
      %p193 = scmp.ne.s32.totalorder %s184, %s185
      %p194 = scmp.eq.s32.totalorder %s27, 0
      %p195 = por %p193, %p194
      %p196 = scmp.ne.s32.totalorder %s184, %s185
      %p197 = scmp.eq.s32.totalorder %s28, 3
      %p198 = por %p196, %p197
      %p200 = scmp.ne.s32.totalorder %s185, %s199
      %p201 = scmp.eq.s32.totalorder %s28, 0
      %p202 = por %p200, %p201
      %s204 = sadd.s32 %s203, 1
      %p207 = scmp.eq.s32.totalorder %s22, 3
      %p208 = scmp.ne.s32.totalorder %s203, %s205
      %p209 = scmp.eq.s32.totalorder %s22, 0
      %p210 = por %p208, %p209
      %p211 = scmp.ne.s32.totalorder %s203, %s205
      %p212 = scmp.eq.s32.totalorder %s27, 3
      %p213 = por %p211, %p212
      %p214 = scmp.ne.s32.totalorder %s205, %s206
      %p215 = scmp.eq.s32.totalorder %s27, 0
      %p216 = por %p214, %p215
      %p217 = scmp.ne.s32.totalorder %s205, %s206
      %p218 = scmp.eq.s32.totalorder %s28, 3
      %p219 = por %p217, %p218
      %p221 = scmp.ne.s32.totalorder %s206, %s220
      %p222 = scmp.eq.s32.totalorder %s28, 0
      %p223 = por %p221, %p222
      %s225 = sadd.s32 %s224, 1
      %p228 = scmp.eq.s32.totalorder %s22, 3
      %p229 = scmp.ne.s32.totalorder %s224, %s226
      %p230 = scmp.eq.s32.totalorder %s22, 0
      %p231 = por %p229, %p230
      %p232 = scmp.ne.s32.totalorder %s224, %s226
      %p233 = scmp.eq.s32.totalorder %s27, 3
      %p234 = por %p232, %p233
      %p235 = scmp.ne.s32.totalorder %s226, %s227
      %p236 = scmp.eq.s32.totalorder %s27, 0
      %p237 = por %p235, %p236
      %p238 = scmp.ne.s32.totalorder %s226, %s227
      %p239 = scmp.eq.s32.totalorder %s28, 3
      %p240 = por %p238, %p239
      %p242 = scmp.ne.s32.totalorder %s227, %s241
      %p243 = scmp.eq.s32.totalorder %s28, 0
      %p244 = por %p242, %p243
      %s246 = sadd.s32 %s245, 1
      %p249 = scmp.eq.s32.totalorder %s22, 3
      %p250 = scmp.ne.s32.totalorder %s245, %s247
      %p251 = scmp.eq.s32.totalorder %s22, 0
      %p252 = por %p250, %p251
      %p253 = scmp.ne.s32.totalorder %s245, %s247
      %p254 = scmp.eq.s32.totalorder %s27, 3
      %p255 = por %p253, %p254
      %p256 = scmp.ne.s32.totalorder %s247, %s248
      %p257 = scmp.eq.s32.totalorder %s27, 0
      %p258 = por %p256, %p257
      %p259 = scmp.ne.s32.totalorder %s247, %s248
      %p260 = scmp.eq.s32.totalorder %s28, 3
      %p261 = por %p259, %p260
      %p263 = scmp.ne.s32.totalorder %s248, %s262
      %p264 = scmp.eq.s32.totalorder %s28, 0
      %p265 = por %p263, %p264
      %s267 = sadd.s32 %s266, 1
      %p270 = scmp.eq.s32.totalorder %s22, 3
      %p271 = scmp.ne.s32.totalorder %s266, %s268
      %p272 = scmp.eq.s32.totalorder %s22, 0
      %p273 = por %p271, %p272
      %p274 = scmp.ne.s32.totalorder %s266, %s268
      %p275 = scmp.eq.s32.totalorder %s27, 3
      %p276 = por %p274, %p275
      %p277 = scmp.ne.s32.totalorder %s268, %s269
      %p278 = scmp.eq.s32.totalorder %s27, 0
      %p279 = por %p277, %p278
      %p280 = scmp.ne.s32.totalorder %s268, %s269
      %p281 = scmp.eq.s32.totalorder %s28, 3
      %p282 = por %p280, %p281
      %p284 = scmp.ne.s32.totalorder %s269, %s283
      %p285 = scmp.eq.s32.totalorder %s28, 0
      %p286 = por %p284, %p285
      %s288 = sadd.s32 %s287, 1
      %p291 = scmp.eq.s32.totalorder %s22, 3
      %p292 = scmp.ne.s32.totalorder %s287, %s289
      %p293 = scmp.eq.s32.totalorder %s22, 0
      %p294 = por %p292, %p293
      %p295 = scmp.ne.s32.totalorder %s287, %s289
      %p296 = scmp.eq.s32.totalorder %s27, 3
      %p297 = por %p295, %p296
      %p298 = scmp.ne.s32.totalorder %s289, %s290
      %p299 = scmp.eq.s32.totalorder %s27, 0
      %p300 = por %p298, %p299
      %p301 = scmp.ne.s32.totalorder %s289, %s290
      %p302 = scmp.eq.s32.totalorder %s28, 3
      %p303 = por %p301, %p302
      %p305 = scmp.ne.s32.totalorder %s290, %s304
      %p306 = scmp.eq.s32.totalorder %s28, 0
      %p307 = por %p305, %p306
      %s308 = ssub.s32 %s22, %s29
      %p309 = scmp.eq.s32.totalorder %s308, 0
      %s311 = sadd.s32 %s310, 1
      %s312 = scalar_select %p309, %s310, %s311
      %p315 = pneg %p309
      %p316 = scmp.eq.s32.totalorder %s22, 3
      %p317 = por %p315, %p316
      %p318 = scmp.ne.s32.totalorder %s310, %s313
      %p319 = scmp.eq.s32.totalorder %s22, 0
      %p320 = por %p318, %p319
      %p321 = scmp.ne.s32.totalorder %s310, %s313
      %p322 = scmp.eq.s32.totalorder %s27, 3
      %p323 = por %p321, %p322
      %p324 = scmp.ne.s32.totalorder %s313, %s314
      %p325 = scmp.eq.s32.totalorder %s27, 0
      %p326 = por %p324, %p325
      %p327 = scmp.ne.s32.totalorder %s313, %s314
      %p328 = scmp.eq.s32.totalorder %s28, 3
      %p329 = por %p327, %p328
      %p331 = scmp.ne.s32.totalorder %s314, %s330
      %p332 = scmp.eq.s32.totalorder %s28, 0
      %p333 = por %p331, %p332
      %p334 = scmp.le.s32.totalorder 1, %s22
      %p335 = scmp.lt.s32.totalorder %s22, 5
      %p336 = pnand %p334, %p335
      %p337 = pneg %p336
      // Predicated region
      $region9: #{cnn_1d_forward.1} parent=5 // pred_check
        _
      $region10: #{cnn_1d_forward.1} parent=5 // pred_check_branch
        %339 = sbr.rel (%p336) target = $region12
      $region11: #{cnn_1d_forward.1} parent=5 // pred_region
        %s340 = ssub.s32 %s22, 1
        // Predicated region
        $region13: #{cnn_1d_forward.1} parent=11 // pred_check
          %p341 = pneg %p69
        $region14: #{cnn_1d_forward.1} parent=11 // pred_check_branch
          %343 = sbr.rel (%p341) target = $region16
        $region15: #{cnn_1d_forward.1} parent=11 // pred_region
          _
        $region16: #{cnn_1d_forward.1} parent=11 // pred_fallthru
          _
        // Predicated region
        $region17: #{cnn_1d_forward.1} parent=11 // pred_check
          %p344 = pneg %p90
        $region18: #{cnn_1d_forward.1} parent=11 // pred_check_branch
          %346 = sbr.rel (%p344) target = $region20
        $region19: #{cnn_1d_forward.1} parent=11 // pred_region
          _
        $region20: #{cnn_1d_forward.1} parent=11 // pred_fallthru
          _
        // Predicated region
        $region21: #{cnn_1d_forward.1} parent=11 // pred_check
          %p347 = pneg %p111
        $region22: #{cnn_1d_forward.1} parent=11 // pred_check_branch
          %349 = sbr.rel (%p347) target = $region24
        $region23: #{cnn_1d_forward.1} parent=11 // pred_region
          _
        $region24: #{cnn_1d_forward.1} parent=11 // pred_fallthru
          _
        // Predicated region
        $region25: #{cnn_1d_forward.1} parent=11 // pred_check
          %p350 = pneg %p132
        $region26: #{cnn_1d_forward.1} parent=11 // pred_check_branch
          %352 = sbr.rel (%p350) target = $region28
        $region27: #{cnn_1d_forward.1} parent=11 // pred_region
          _
        $region28: #{cnn_1d_forward.1} parent=11 // pred_fallthru
          _
        // Predicated region
        $region29: #{cnn_1d_forward.1} parent=11 // pred_check
          %p353 = pneg %p153
        $region30: #{cnn_1d_forward.1} parent=11 // pred_check_branch
          %355 = sbr.rel (%p353) target = $region32
        $region31: #{cnn_1d_forward.1} parent=11 // pred_region
          _
        $region32: #{cnn_1d_forward.1} parent=11 // pred_fallthru
          _
        // Predicated region
        $region33: #{cnn_1d_forward.1} parent=11 // pred_check
          %p356 = pneg %p174
        $region34: #{cnn_1d_forward.1} parent=11 // pred_check_branch
          %358 = sbr.rel (%p356) target = $region36
        $region35: #{cnn_1d_forward.1} parent=11 // pred_region
          _
        $region36: #{cnn_1d_forward.1} parent=11 // pred_fallthru
          _
        // Predicated region
        $region37: #{cnn_1d_forward.1} parent=11 // pred_check
          %p359 = pneg %p195
        $region38: #{cnn_1d_forward.1} parent=11 // pred_check_branch
          %361 = sbr.rel (%p359) target = $region40
        $region39: #{cnn_1d_forward.1} parent=11 // pred_region
          _
        $region40: #{cnn_1d_forward.1} parent=11 // pred_fallthru
          _
        // Predicated region
        $region41: #{cnn_1d_forward.1} parent=11 // pred_check
          %p362 = pneg %p216
        $region42: #{cnn_1d_forward.1} parent=11 // pred_check_branch
          %364 = sbr.rel (%p362) target = $region44
        $region43: #{cnn_1d_forward.1} parent=11 // pred_region
          _
        $region44: #{cnn_1d_forward.1} parent=11 // pred_fallthru
          _
        // Predicated region
        $region45: #{cnn_1d_forward.1} parent=11 // pred_check
          %p365 = pneg %p237
        $region46: #{cnn_1d_forward.1} parent=11 // pred_check_branch
          %367 = sbr.rel (%p365) target = $region48
        $region47: #{cnn_1d_forward.1} parent=11 // pred_region
          _
        $region48: #{cnn_1d_forward.1} parent=11 // pred_fallthru
          _
        // Predicated region
        $region49: #{cnn_1d_forward.1} parent=11 // pred_check
          %p368 = pneg %p258
        $region50: #{cnn_1d_forward.1} parent=11 // pred_check_branch
          %370 = sbr.rel (%p368) target = $region52
        $region51: #{cnn_1d_forward.1} parent=11 // pred_region
          _
        $region52: #{cnn_1d_forward.1} parent=11 // pred_fallthru
          _
        // Predicated region
        $region53: #{cnn_1d_forward.1} parent=11 // pred_check
          %p371 = pneg %p279
        $region54: #{cnn_1d_forward.1} parent=11 // pred_check_branch
          %373 = sbr.rel (%p371) target = $region56
        $region55: #{cnn_1d_forward.1} parent=11 // pred_region
          _
        $region56: #{cnn_1d_forward.1} parent=11 // pred_fallthru
          _
        // Predicated region
        $region57: #{cnn_1d_forward.1} parent=11 // pred_check
          %p374 = pneg %p300
        $region58: #{cnn_1d_forward.1} parent=11 // pred_check_branch
          %376 = sbr.rel (%p374) target = $region60
        $region59: #{cnn_1d_forward.1} parent=11 // pred_region
          _
        $region60: #{cnn_1d_forward.1} parent=11 // pred_fallthru
          _
      $region12: #{cnn_1d_forward.1} parent=5 // pred_fallthru
        _
      %p377 = scmp.lt.s32.totalorder %s22, 4
      // Predicated region
      $region61: #{cnn_1d_forward.1} parent=5 // pred_check
        %p378 = pneg %p377
      $region62: #{cnn_1d_forward.1} parent=5 // pred_check_branch
        %380 = sbr.rel (%p378) target = $region64
      $region63: #{cnn_1d_forward.1} parent=5 // pred_region
        // Predicated region
        $region65: #{cnn_1d_forward.1} parent=63 // pred_check
          %p381 = pneg %p42
        $region66: #{cnn_1d_forward.1} parent=63 // pred_check_branch
          %383 = sbr.rel (%p381) target = $region68
        $region67: #{cnn_1d_forward.1} parent=63 // pred_region
          %p384 = scmp.lt.s32.totalorder %s22, 3
          %s385 = scalar_select %p384, %s22, 3
          %s386 = smul.addr %s385, 8
          %s387 = smul.addr %s386, 8
          %s388 = scalar_lea.vmem %s0, %s387
        $region68: #{cnn_1d_forward.1} parent=63 // pred_fallthru
          _
      $region64: #{cnn_1d_forward.1} parent=5 // pred_fallthru
        _
      %p389 = scmp.le.s32.totalorder 1, %s22
      %p390 = scmp.lt.s32.totalorder %s22, 5
      %p391 = pnand %p389, %p390
      %p392 = pneg %p391
      // Predicated region
      $region69: #{cnn_1d_forward.1} parent=5 // pred_check
        _
      $region70: #{cnn_1d_forward.1} parent=5 // pred_check_branch
        %394 = sbr.rel (%p391) target = $region72
      $region71: #{cnn_1d_forward.1} parent=5 // pred_region
        %s395 = ssub.s32 %s22, 1
        %p396 = scmp.lt.s32.totalorder %s27, 3
        %s397 = scalar_select %p396, %s27, 3
        %s398 = smul.addr %s397, 8
        %s399 = smul.addr %s398, 8
        %s400 = scalar_lea.vmem %s0, %s399
        %p401 = pneg %p48
        %p402 = pneg %p45
        %p403 = pneg %p69
        %p404 = pneg %p66
        %p405 = pneg %p90
        %p406 = pneg %p87
        %p407 = pneg %p111
        %p408 = pneg %p108
        %p409 = pneg %p132
        %p410 = pneg %p129
        %p411 = pneg %p153
        %p412 = pneg %p150
        %p413 = pneg %p174
        %p414 = pneg %p171
        %p415 = pneg %p195
        %p416 = pneg %p192
        %p417 = pneg %p216
        %p418 = pneg %p213
        %p419 = pneg %p237
        %p420 = pneg %p234
        %p421 = pneg %p258
        %p422 = pneg %p255
        %p423 = pneg %p279
        %p424 = pneg %p276
        %p425 = pneg %p300
        %p426 = pneg %p297
        %p427 = pneg %p326
        %p428 = pneg %p323
        %s429 = sand.u32 %s313, 1
        %s430 = scalar_lea.sflag [#allocation7], %s429
        %s431 = sand.u32 %s313, 1
        %s432 = scalar_lea.vmem [#allocation6], %s431
        %p433 = scmp.lt.s32.totalorder %s27, 3
        %s434 = scalar_select %p433, %s27, 3
        %s435 = smul.addr %s434, 8
        %s436 = smul.addr %s435, 8
        %s437 = scalar_lea.vmem %s0, %s436
        %v438 = vld [vmem:[%s437] sm:$0xff]
        %v439 = vld [vmem:[%s437 + $0x8] sm:$0xff]
        %v440 = vld [vmem:[%s437 + $0x10] sm:$0xff]
        %v441 = vld [vmem:[%s437 + $0x18] sm:$0xff]
        %v442 = vld [vmem:[%s437 + $0x20] sm:$0xff]
        %v443 = vld [vmem:[%s437 + $0x28] sm:$0xff]
        %v444 = vld [vmem:[%s437 + $0x30] sm:$0xff]
        %v445 = vld [vmem:[%s437 + $0x38] sm:$0x3f]
        %v446 = vld [vmem:[%s1] sm:$0x1]
        %448 = vset.pattern.permute.xlu0 0
        %449 = vperm.xlu0 %448, %v438
        %v450 = vpop.permute.xlu0 %449
        %453 = vset.pattern.permute.xlu0 0
        %454 = vperm.xlu0 %453, %v439
        %v455 = vpop.permute.xlu0 %454
        %458 = vset.pattern.permute.xlu0 0
        %459 = vperm.xlu0 %458, %v440
        %v460 = vpop.permute.xlu0 %459
        %463 = vset.pattern.permute.xlu0 0
        %464 = vperm.xlu0 %463, %v441
        %v465 = vpop.permute.xlu0 %464
        %468 = vset.pattern.permute.xlu0 0
        %469 = vperm.xlu0 %468, %v442
        %v470 = vpop.permute.xlu0 %469
        %473 = vset.pattern.permute.xlu0 0
        %474 = vperm.xlu0 %473, %v443
        %v475 = vpop.permute.xlu0 %474
        %478 = vset.pattern.permute.xlu0 0
        %479 = vperm.xlu0 %478, %v444
        %v480 = vpop.permute.xlu0 %479
        %483 = vset.pattern.permute.xlu0 0
        %484 = vperm.xlu0 %483, %v445
        %v485 = vpop.permute.xlu0 %484
        %v488 = vperm.slane %v446, 0
        %v490 = vmul.f32 %v450, %v488
        %v491 = vmul.f32 %v455, %v488
        %v492 = vmul.f32 %v460, %v488
        %v493 = vmul.f32 %v465, %v488
        %v494 = vmul.f32 %v470, %v488
        %v495 = vmul.f32 %v475, %v488
        %v496 = vmul.f32 %v480, %v488
        %v497 = vmul.f32 %v485, %v488
        %v498 = vld [vmem:[%s437 + $0x1] sm:$0xff]
        %v499 = vld [vmem:[%s437 + $0x9] sm:$0xff]
        %v500 = vld [vmem:[%s437 + $0x11] sm:$0xff]
        %v501 = vld [vmem:[%s437 + $0x19] sm:$0xff]
        %v502 = vld [vmem:[%s437 + $0x21] sm:$0xff]
        %v503 = vld [vmem:[%s437 + $0x29] sm:$0xff]
        %v504 = vld [vmem:[%s437 + $0x31] sm:$0xff]
        %v505 = vld [vmem:[%s437 + $0x39] sm:$0x3f]
        %s506 = scalar_lea.vmem %s1, 1
        %v507 = vld [vmem:[%s506] sm:$0x1]
        %509 = vset.pattern.permute.xlu0 0
        %510 = vperm.xlu0 %509, %v498
        %v511 = vpop.permute.xlu0 %510
        %514 = vset.pattern.permute.xlu0 0
        %515 = vperm.xlu0 %514, %v499
        %v516 = vpop.permute.xlu0 %515
        %519 = vset.pattern.permute.xlu0 0
        %520 = vperm.xlu0 %519, %v500
        %v521 = vpop.permute.xlu0 %520
        %524 = vset.pattern.permute.xlu0 0
        %525 = vperm.xlu0 %524, %v501
        %v526 = vpop.permute.xlu0 %525
        %529 = vset.pattern.permute.xlu0 0
        %530 = vperm.xlu0 %529, %v502
        %v531 = vpop.permute.xlu0 %530
        %534 = vset.pattern.permute.xlu0 0
        %535 = vperm.xlu0 %534, %v503
        %v536 = vpop.permute.xlu0 %535
        %539 = vset.pattern.permute.xlu0 0
        %540 = vperm.xlu0 %539, %v504
        %v541 = vpop.permute.xlu0 %540
        %544 = vset.pattern.permute.xlu0 0
        %545 = vperm.xlu0 %544, %v505
        %v546 = vpop.permute.xlu0 %545
        %v549 = vperm.slane %v507, 0
        %v551 = vmul.f32 %v511, %v549
        %v552 = vmul.f32 %v516, %v549
        %v553 = vmul.f32 %v521, %v549
        %v554 = vmul.f32 %v526, %v549
        %v555 = vmul.f32 %v531, %v549
        %v556 = vmul.f32 %v536, %v549
        %v557 = vmul.f32 %v541, %v549
        %v558 = vmul.f32 %v546, %v549
        %v559 = vadd.f32 %v490, %v551
        %v560 = vadd.f32 %v491, %v552
        %v561 = vadd.f32 %v492, %v553
        %v562 = vadd.f32 %v493, %v554
        %v563 = vadd.f32 %v494, %v555
        %v564 = vadd.f32 %v495, %v556
        %v565 = vadd.f32 %v496, %v557
        %v566 = vadd.f32 %v497, %v558
        %v567 = vld [vmem:[%s437 + $0x2] sm:$0xff]
        %v568 = vld [vmem:[%s437 + $0xa] sm:$0xff]
        %v569 = vld [vmem:[%s437 + $0x12] sm:$0xff]
        %v570 = vld [vmem:[%s437 + $0x1a] sm:$0xff]
        %v571 = vld [vmem:[%s437 + $0x22] sm:$0xff]
        %v572 = vld [vmem:[%s437 + $0x2a] sm:$0xff]
        %v573 = vld [vmem:[%s437 + $0x32] sm:$0xff]
        %v574 = vld [vmem:[%s437 + $0x3a] sm:$0x3f]
        %s575 = scalar_lea.vmem %s1, 2
        %v576 = vld [vmem:[%s575] sm:$0x1]
        %578 = vset.pattern.permute.xlu0 0
        %579 = vperm.xlu0 %578, %v567
        %v580 = vpop.permute.xlu0 %579
        %583 = vset.pattern.permute.xlu0 0
        %584 = vperm.xlu0 %583, %v568
        %v585 = vpop.permute.xlu0 %584
        %588 = vset.pattern.permute.xlu0 0
        %589 = vperm.xlu0 %588, %v569
        %v590 = vpop.permute.xlu0 %589
        %593 = vset.pattern.permute.xlu0 0
        %594 = vperm.xlu0 %593, %v570
        %v595 = vpop.permute.xlu0 %594
        %598 = vset.pattern.permute.xlu0 0
        %599 = vperm.xlu0 %598, %v571
        %v600 = vpop.permute.xlu0 %599
        %603 = vset.pattern.permute.xlu0 0
        %604 = vperm.xlu0 %603, %v572
        %v605 = vpop.permute.xlu0 %604
        %608 = vset.pattern.permute.xlu0 0
        %609 = vperm.xlu0 %608, %v573
        %v610 = vpop.permute.xlu0 %609
        %613 = vset.pattern.permute.xlu0 0
        %614 = vperm.xlu0 %613, %v574
        %v615 = vpop.permute.xlu0 %614
        %v618 = vperm.slane %v576, 0
        %v620 = vmul.f32 %v580, %v618
        %v621 = vmul.f32 %v585, %v618
        %v622 = vmul.f32 %v590, %v618
        %v623 = vmul.f32 %v595, %v618
        %v624 = vmul.f32 %v600, %v618
        %v625 = vmul.f32 %v605, %v618
        %v626 = vmul.f32 %v610, %v618
        %v627 = vmul.f32 %v615, %v618
        %v628 = vadd.f32 %v559, %v620
        %v629 = vadd.f32 %v560, %v621
        %v630 = vadd.f32 %v561, %v622
        %v631 = vadd.f32 %v562, %v623
        %v632 = vadd.f32 %v563, %v624
        %v633 = vadd.f32 %v564, %v625
        %v634 = vadd.f32 %v565, %v626
        %v635 = vadd.f32 %v566, %v627
        %v636 = vld [vmem:[%s2] sm:$0x1]
        %v638 = vperm.slane %v636, 0
        %v640 = vadd.f32 %v628, %v638
        %v641 = vadd.f32 %v629, %v638
        %v642 = vadd.f32 %v630, %v638
        %v643 = vadd.f32 %v631, %v638
        %v644 = vadd.f32 %v632, %v638
        %v645 = vadd.f32 %v633, %v638
        %v646 = vadd.f32 %v634, %v638
        %v647 = vadd.f32 %v635, %v638
        %v648 = vmax.f32 %v640, 0.0
        %v649 = vmax.f32 %v641, 0.0
        %v650 = vmax.f32 %v642, 0.0
        %v651 = vmax.f32 %v643, 0.0
        %v652 = vmax.f32 %v644, 0.0
        %v653 = vmax.f32 %v645, 0.0
        %v654 = vmax.f32 %v646, 0.0
        %v655 = vmax.f32 %v647, 0.0
        %vm656 = vcmask 48128
        %657 = vst.msk [vmem:[#allocation2] sm:$0xff] %vm656, %v648
        %658 = vst.msk [vmem:[#allocation2 + $0x8] sm:$0xff] %vm656, %v649
        %659 = vst.msk [vmem:[#allocation2 + $0x10] sm:$0xff] %vm656, %v650
        %660 = vst.msk [vmem:[#allocation2 + $0x18] sm:$0xff] %vm656, %v651
        %661 = vst.msk [vmem:[#allocation2 + $0x20] sm:$0xff] %vm656, %v652
        %662 = vst.msk [vmem:[#allocation2 + $0x28] sm:$0xff] %vm656, %v653
        %663 = vst.msk [vmem:[#allocation2 + $0x30] sm:$0xff] %vm656, %v654
        %vm664 = vcmask 46080
        %665 = vst.msk [vmem:[#allocation2 + $0x38] sm:$0x3f] %vm664, %v655
        %v666 = vld [vmem:[#allocation2] ss:$2 sm:$0xff]
        %s667 = scalar_lea.vmem [#allocation2], 16
        %v668 = vld [vmem:[%s667] ss:$2 sm:$0xff]
        %s669 = scalar_lea.vmem [#allocation2], 32
        %v670 = vld [vmem:[%s669] ss:$2 sm:$0xff]
        %s671 = scalar_lea.vmem [#allocation2], 48
        %v672 = vld [vmem:[%s671] ss:$2 sm:$0x1f]
        %s673 = scalar_lea.vmem [#allocation2], 1
        %v674 = vld [vmem:[%s673] ss:$2 sm:$0xff]
        %s675 = scalar_lea.vmem [#allocation2], 17
        %v676 = vld [vmem:[%s675] ss:$2 sm:$0xff]
        %s677 = scalar_lea.vmem [#allocation2], 33
        %v678 = vld [vmem:[%s677] ss:$2 sm:$0xff]
        %s679 = scalar_lea.vmem [#allocation2], 49
        %v680 = vld [vmem:[%s679] ss:$2 sm:$0x1f]
        %v681 = vmax.f32 %v666, %v674
        %v682 = vmax.f32 %v668, %v676
        %v683 = vmax.f32 %v670, %v678
        %v684 = vmax.f32 %v672, %v680
        %v685 = vld [vmem:[%s3] sm:$0x3f]
        %s686 = scalar_lea.vmem [#allocation2], 2
        %v687 = vld [vmem:[%s686] ss:$2 sm:$0xff]
        %s688 = scalar_lea.vmem [#allocation2], 18
        %v689 = vld [vmem:[%s688] ss:$2 sm:$0xff]
        %s690 = scalar_lea.vmem [#allocation2], 34
        %v691 = vld [vmem:[%s690] ss:$2 sm:$0xff]
        %s692 = scalar_lea.vmem [#allocation2], 50
        %v693 = vld [vmem:[%s692] ss:$2 sm:$0x1f]
        %s694 = scalar_lea.vmem [#allocation2], 3
        %v695 = vld [vmem:[%s694] ss:$2 sm:$0xff]
        %s696 = scalar_lea.vmem [#allocation2], 19
        %v697 = vld [vmem:[%s696] ss:$2 sm:$0xff]
        %s698 = scalar_lea.vmem [#allocation2], 35
        %v699 = vld [vmem:[%s698] ss:$2 sm:$0xff]
        %s700 = scalar_lea.vmem [#allocation2], 51
        %v701 = vld [vmem:[%s700] ss:$2 sm:$0x1f]
        %v702 = vmax.f32 %v687, %v695
        %v703 = vmax.f32 %v689, %v697
        %v704 = vmax.f32 %v691, %v699
        %v705 = vmax.f32 %v693, %v701
        %s706 = scalar_lea.vmem %s3, 8
        %v707 = vld [vmem:[%s706] sm:$0x3f]
        %v709 = vsel %vm656, %v702, 0
        %v712 = vsel %vm656, %v703, 0
        %v715 = vsel %vm656, %v704, 0
        %v718 = vsel %vm656, %v705, 0
        %vm720 = vcmask 1045504
        %v722 = vsel %vm720, %v707, 0
        %724 = vmatpush.msra.mxu0 0.0
        %725 = vmatpush.msra.mxu0 0.0
        %726 = vmatpush.msra.mxu0 0.0
        %727 = vmatpush.msra.mxu0 0.0
        %728 = vmatpush.msra.mxu0 0.0
        %729 = vmatpush.msra.mxu0 0.0
        %730 = vmatpush.msra.mxu0 0.0
        %731 = vmatpush.msra.mxu0 0.0
        %732 = vmatpush.msra.mxu0 0.0
        %733 = vmatpush.msra.mxu0 0.0
        %734 = vmatpush.msra.mxu0 0.0
        %735 = vmatpush.msra.mxu0 0.0
        %736 = vmatpush.msra.mxu0 0.0
        %737 = vmatpush.msra.mxu0 0.0
        %738 = vmatpush.msra.mxu0 0.0
        %739 = vmatpush.msra.mxu0 %v722
        %740 = vmatmul.f32.gmra.mxu0 %v709
        %v741 = vpop.f32.mrf.mxu0
        %v742 = vadd.f32 0.0, %v741
        %743 = vmatmul.f32.gmra.mxu0 %v712
        %v744 = vpop.f32.mrf.mxu0
        %v745 = vadd.f32 0.0, %v744
        %746 = vmatmul.f32.gmra.mxu0 %v715
        %v747 = vpop.f32.mrf.mxu0
        %v748 = vadd.f32 0.0, %v747
        %749 = vmatmul.f32.gmra.mxu0 %v718
        %v750 = vpop.f32.mrf.mxu0
        %v751 = vadd.f32 0.0, %v750
        %752 = vdwg.mxu0
        %v754 = vsel %vm656, %v681, 0
        %v757 = vsel %vm656, %v682, 0
        %v760 = vsel %vm656, %v683, 0
        %v763 = vsel %vm656, %v684, 0
        %v766 = vsel %vm720, %v685, 0
        %768 = vmatpush.msra.mxu0 0.0
        %769 = vmatpush.msra.mxu0 0.0
        %770 = vmatpush.msra.mxu0 0.0
        %771 = vmatpush.msra.mxu0 0.0
        %772 = vmatpush.msra.mxu0 0.0
        %773 = vmatpush.msra.mxu0 0.0
        %774 = vmatpush.msra.mxu0 0.0
        %775 = vmatpush.msra.mxu0 0.0
        %776 = vmatpush.msra.mxu0 0.0
        %777 = vmatpush.msra.mxu0 0.0
        %778 = vmatpush.msra.mxu0 0.0
        %779 = vmatpush.msra.mxu0 0.0
        %780 = vmatpush.msra.mxu0 0.0
        %781 = vmatpush.msra.mxu0 0.0
        %782 = vmatpush.msra.mxu0 0.0
        %783 = vmatpush.msra.mxu0 %v766
        %784 = vmatmul.f32.gmra.mxu0 %v754
        %v785 = vpop.f32.mrf.mxu0
        %v786 = vadd.f32 %v742, %v785
        %787 = vmatmul.f32.gmra.mxu0 %v757
        %v788 = vpop.f32.mrf.mxu0
        %v789 = vadd.f32 %v745, %v788
        %790 = vmatmul.f32.gmra.mxu0 %v760
        %v791 = vpop.f32.mrf.mxu0
        %v792 = vadd.f32 %v748, %v791
        %793 = vmatmul.f32.gmra.mxu0 %v763
        %v794 = vpop.f32.mrf.mxu0
        %v795 = vadd.f32 %v751, %v794
        %796 = vdwg.mxu0
        %s797 = scalar_lea.vmem [#allocation2], 4
        %v798 = vld [vmem:[%s797] ss:$2 sm:$0xff]
        %s799 = scalar_lea.vmem [#allocation2], 20
        %v800 = vld [vmem:[%s799] ss:$2 sm:$0xff]
        %s801 = scalar_lea.vmem [#allocation2], 36
        %v802 = vld [vmem:[%s801] ss:$2 sm:$0xff]
        %s803 = scalar_lea.vmem [#allocation2], 52
        %v804 = vld [vmem:[%s803] ss:$2 sm:$0x1f]
        %s805 = scalar_lea.vmem [#allocation2], 5
        %v806 = vld [vmem:[%s805] ss:$2 sm:$0xff]
        %s807 = scalar_lea.vmem [#allocation2], 21
        %v808 = vld [vmem:[%s807] ss:$2 sm:$0xff]
        %s809 = scalar_lea.vmem [#allocation2], 37
        %v810 = vld [vmem:[%s809] ss:$2 sm:$0xff]
        %s811 = scalar_lea.vmem [#allocation2], 53
        %v812 = vld [vmem:[%s811] ss:$2 sm:$0x1f]
        %v813 = vmax.f32 %v798, %v806
        %v814 = vmax.f32 %v800, %v808
        %v815 = vmax.f32 %v802, %v810
        %v816 = vmax.f32 %v804, %v812
        %s817 = scalar_lea.vmem %s3, 16
        %v818 = vld [vmem:[%s817] sm:$0x3f]
        %v820 = vsel %vm656, %v813, 0
        %v823 = vsel %vm656, %v814, 0
        %v826 = vsel %vm656, %v815, 0
        %v829 = vsel %vm656, %v816, 0
        %v832 = vsel %vm720, %v818, 0
        %834 = vmatpush.msra.mxu0 0.0
        %835 = vmatpush.msra.mxu0 0.0
        %836 = vmatpush.msra.mxu0 0.0
        %837 = vmatpush.msra.mxu0 0.0
        %838 = vmatpush.msra.mxu0 0.0
        %839 = vmatpush.msra.mxu0 0.0
        %840 = vmatpush.msra.mxu0 0.0
        %841 = vmatpush.msra.mxu0 0.0
        %842 = vmatpush.msra.mxu0 0.0
        %843 = vmatpush.msra.mxu0 0.0
        %844 = vmatpush.msra.mxu0 0.0
        %845 = vmatpush.msra.mxu0 0.0
        %846 = vmatpush.msra.mxu0 0.0
        %847 = vmatpush.msra.mxu0 0.0
        %848 = vmatpush.msra.mxu0 0.0
        %849 = vmatpush.msra.mxu0 %v832
        %850 = vmatmul.f32.gmra.mxu0 %v820
        %v851 = vpop.f32.mrf.mxu0
        %v852 = vadd.f32 0.0, %v851
        %853 = vmatmul.f32.gmra.mxu0 %v823
        %v854 = vpop.f32.mrf.mxu0
        %v855 = vadd.f32 0.0, %v854
        %856 = vmatmul.f32.gmra.mxu0 %v826
        %v857 = vpop.f32.mrf.mxu0
        %v858 = vadd.f32 0.0, %v857
        %859 = vmatmul.f32.gmra.mxu0 %v829
        %v860 = vpop.f32.mrf.mxu0
        %v861 = vadd.f32 0.0, %v860
        %862 = vdwg.mxu0
        %v863 = vadd.f32 %v786, %v852
        %v864 = vadd.f32 %v789, %v855
        %v865 = vadd.f32 %v792, %v858
        %v866 = vadd.f32 %v795, %v861
        %v867 = vld [vmem:[%s4] sm:$0x1]
        %v869 = vperm.slane %v867, 0
        %v871 = vadd.f32 %v863, %v869
        %v872 = vadd.f32 %v864, %v869
        %v873 = vadd.f32 %v865, %v869
        %v874 = vadd.f32 %v866, %v869
        %v875 = vmax.f32 %v871, 0.0
        %v876 = vmax.f32 %v872, 0.0
        %v877 = vmax.f32 %v873, 0.0
        %v878 = vmax.f32 %v874, 0.0
        %vm879 = vcmask 97280
        %880 = vst.msk [vmem:[#allocation3] sm:$0xff] %vm879, %v875
        %881 = vst.msk [vmem:[#allocation3 + $0x8] sm:$0xff] %vm879, %v876
        %882 = vst.msk [vmem:[#allocation3 + $0x10] sm:$0xff] %vm879, %v877
        %vm883 = vcmask 94208
        %884 = vst.msk [vmem:[#allocation3 + $0x18] sm:$0x1f] %vm883, %v878
        %v885 = vld [vmem:[#allocation3] ss:$2 sm:$0xff]
        %s886 = scalar_lea.vmem [#allocation3], 16
        %v887 = vld [vmem:[%s886] ss:$2 sm:$0xf]
        %s888 = scalar_lea.vmem [#allocation3], 1
        %v889 = vld [vmem:[%s888] ss:$2 sm:$0xff]
        %s890 = scalar_lea.vmem [#allocation3], 17
        %v891 = vld [vmem:[%s890] ss:$2 sm:$0xf]
        %v892 = vmax.f32 %v885, %v889
        %v893 = vmax.f32 %v887, %v891
        %v894 = vld [vmem:[%s5] sm:$0xff]
        %v895 = vld [vmem:[%s5 + $0x8] sm:$0xf]
        %s896 = scalar_lea.vmem [#allocation3], 2
        %v897 = vld [vmem:[%s896] ss:$2 sm:$0xff]
        %s898 = scalar_lea.vmem [#allocation3], 18
        %v899 = vld [vmem:[%s898] ss:$2 sm:$0xf]
        %s900 = scalar_lea.vmem [#allocation3], 3
        %v901 = vld [vmem:[%s900] ss:$2 sm:$0xff]
        %s902 = scalar_lea.vmem [#allocation3], 19
        %v903 = vld [vmem:[%s902] ss:$2 sm:$0xf]
        %v904 = vmax.f32 %v897, %v901
        %v905 = vmax.f32 %v899, %v903
        %s906 = scalar_lea.vmem %s5, 16
        %v907 = vld [vmem:[%s906] sm:$0xff]
        %v908 = vld [vmem:[%s906 + $0x8] sm:$0xf]
        %v910 = vsel %vm879, %v904, 0
        %v913 = vsel %vm879, %v905, 0
        %vm915 = vcmask 1043456
        %v917 = vsel %vm915, %v908, 0
        %919 = vmatpush.msra.mxu0 0.0
        %920 = vmatpush.msra.mxu0 0.0
        %921 = vmatpush.msra.mxu0 0.0
        %922 = vmatpush.msra.mxu0 0.0
        %923 = vmatpush.msra.mxu0 0.0
        %924 = vmatpush.msra.mxu0 0.0
        %925 = vmatpush.msra.mxu0 0.0
        %926 = vmatpush.msra.mxu0 0.0
        %927 = vmatpush.msra.mxu0 0.0
        %928 = vmatpush.msra.mxu0 0.0
        %929 = vmatpush.msra.mxu0 0.0
        %930 = vmatpush.msra.mxu0 0.0
        %931 = vmatpush.msra.mxu0 0.0
        %932 = vmatpush.msra.mxu0 0.0
        %933 = vmatpush.msra.mxu0 %v917
        %934 = vmatpush.msra.mxu0 %v907
        %935 = vmatmul.f32.gmra.mxu0 %v910
        %v936 = vpop.f32.mrf.mxu0
        %v937 = vadd.f32 0.0, %v936
        %938 = vmatmul.f32.gmra.mxu0 %v913
        %v939 = vpop.f32.mrf.mxu0
        %v940 = vadd.f32 0.0, %v939
        %941 = vdwg.mxu0
        %v943 = vsel %vm879, %v892, 0
        %v946 = vsel %vm879, %v893, 0
        %v949 = vsel %vm915, %v895, 0
        %951 = vmatpush.msra.mxu0 0.0
        %952 = vmatpush.msra.mxu0 0.0
        %953 = vmatpush.msra.mxu0 0.0
        %954 = vmatpush.msra.mxu0 0.0
        %955 = vmatpush.msra.mxu0 0.0
        %956 = vmatpush.msra.mxu0 0.0
        %957 = vmatpush.msra.mxu0 0.0
        %958 = vmatpush.msra.mxu0 0.0
        %959 = vmatpush.msra.mxu0 0.0
        %960 = vmatpush.msra.mxu0 0.0
        %961 = vmatpush.msra.mxu0 0.0
        %962 = vmatpush.msra.mxu0 0.0
        %963 = vmatpush.msra.mxu0 0.0
        %964 = vmatpush.msra.mxu0 0.0
        %965 = vmatpush.msra.mxu0 %v949
        %966 = vmatpush.msra.mxu0 %v894
        %967 = vmatmul.f32.gmra.mxu0 %v943
        %v968 = vpop.f32.mrf.mxu0
        %v969 = vadd.f32 %v937, %v968
        %970 = vmatmul.f32.gmra.mxu0 %v946
        %v971 = vpop.f32.mrf.mxu0
        %v972 = vadd.f32 %v940, %v971
        %973 = vdwg.mxu0
        %s974 = scalar_lea.vmem [#allocation3], 4
        %v975 = vld [vmem:[%s974] ss:$2 sm:$0xff]
        %s976 = scalar_lea.vmem [#allocation3], 20
        %v977 = vld [vmem:[%s976] ss:$2 sm:$0xf]
        %s978 = scalar_lea.vmem [#allocation3], 5
        %v979 = vld [vmem:[%s978] ss:$2 sm:$0xff]
        %s980 = scalar_lea.vmem [#allocation3], 21
        %v981 = vld [vmem:[%s980] ss:$2 sm:$0xf]
        %v982 = vmax.f32 %v975, %v979
        %v983 = vmax.f32 %v977, %v981
        %s984 = scalar_lea.vmem %s5, 32
        %v985 = vld [vmem:[%s984] sm:$0xff]
        %v986 = vld [vmem:[%s984 + $0x8] sm:$0xf]
        %v988 = vsel %vm879, %v982, 0
        %v991 = vsel %vm879, %v983, 0
        %v994 = vsel %vm915, %v986, 0
        %996 = vmatpush.msra.mxu0 0.0
        %997 = vmatpush.msra.mxu0 0.0
        %998 = vmatpush.msra.mxu0 0.0
        %999 = vmatpush.msra.mxu0 0.0
        %1000 = vmatpush.msra.mxu0 0.0
        %1001 = vmatpush.msra.mxu0 0.0
        %1002 = vmatpush.msra.mxu0 0.0
        %1003 = vmatpush.msra.mxu0 0.0
        %1004 = vmatpush.msra.mxu0 0.0
        %1005 = vmatpush.msra.mxu0 0.0
        %1006 = vmatpush.msra.mxu0 0.0
        %1007 = vmatpush.msra.mxu0 0.0
        %1008 = vmatpush.msra.mxu0 0.0
        %1009 = vmatpush.msra.mxu0 0.0
        %1010 = vmatpush.msra.mxu0 %v994
        %1011 = vmatpush.msra.mxu0 %v985
        %1012 = vmatmul.f32.gmra.mxu0 %v988
        %v1013 = vpop.f32.mrf.mxu0
        %v1014 = vadd.f32 0.0, %v1013
        %1015 = vmatmul.f32.gmra.mxu0 %v991
        %v1016 = vpop.f32.mrf.mxu0
        %v1017 = vadd.f32 0.0, %v1016
        %1018 = vdwg.mxu0
        %v1019 = vadd.f32 %v969, %v1014
        %v1020 = vadd.f32 %v972, %v1017
        %v1021 = vld [vmem:[%s6] sm:$0x1]
        %v1023 = vperm.slane %v1021, 0
        %v1025 = vadd.f32 %v1019, %v1023
        %v1026 = vadd.f32 %v1020, %v1023
        %v1027 = vmax.f32 %v1025, 0.0
        %v1028 = vmax.f32 %v1026, 0.0
        %vm1029 = vcmask 195584
        %1030 = vst.msk [vmem:[#allocation4] sm:$0xff] %vm1029, %v1027
        %vm1031 = vcmask 191488
        %1032 = vst.msk [vmem:[#allocation4 + $0x8] sm:$0xf] %vm1031, %v1028
        %v1033 = vld [vmem:[#allocation4] ss:$2 sm:$0xf]
        %s1034 = scalar_lea.vmem [#allocation4], 1
        %v1035 = vld [vmem:[%s1034] ss:$2 sm:$0xf]
        %v1036 = vmax.f32 %v1033, %v1035
        %v1037 = vld [vmem:[%s7] sm:$0xff]
        %v1038 = vld [vmem:[%s7 + $0x8] sm:$0xff]
        %v1039 = vld [vmem:[%s7 + $0x10] sm:$0xff]
        %s1040 = scalar_lea.vmem [#allocation4], 2
        %v1041 = vld [vmem:[%s1040] ss:$2 sm:$0xf]
        %s1042 = scalar_lea.vmem [#allocation4], 3
        %v1043 = vld [vmem:[%s1042] ss:$2 sm:$0xf]
        %v1044 = vmax.f32 %v1041, %v1043
        %s1045 = scalar_lea.vmem %s7, 24
        %v1046 = vld [vmem:[%s1045] sm:$0xff]
        %v1047 = vld [vmem:[%s1045 + $0x8] sm:$0xff]
        %v1048 = vld [vmem:[%s1045 + $0x10] sm:$0xff]
        %v1050 = vsel %vm1029, %v1044, 0
        %1052 = vmatpush.msra.mxu0 0.0
        %1053 = vmatpush.msra.mxu0 0.0
        %1054 = vmatpush.msra.mxu0 0.0
        %1055 = vmatpush.msra.mxu0 0.0
        %1056 = vmatpush.msra.mxu0 0.0
        %1057 = vmatpush.msra.mxu0 0.0
        %1058 = vmatpush.msra.mxu0 0.0
        %1059 = vmatpush.msra.mxu0 0.0
        %1060 = vmatpush.msra.mxu0 0.0
        %1061 = vmatpush.msra.mxu0 0.0
        %1062 = vmatpush.msra.mxu0 0.0
        %1063 = vmatpush.msra.mxu0 0.0
        %1064 = vmatpush.msra.mxu0 0.0
        %1065 = vmatpush.msra.mxu0 %v1048
        %1066 = vmatpush.msra.mxu0 %v1047
        %1067 = vmatpush.msra.mxu0 %v1046
        %1068 = vmatmul.f32.gmra.mxu0 %v1050
        %v1069 = vpop.f32.mrf.mxu0
        %v1070 = vadd.f32 0.0, %v1069
        %1071 = vdwg.mxu0
        %v1073 = vsel %vm1029, %v1036, 0
        %1075 = vmatpush.msra.mxu0 0.0
        %1076 = vmatpush.msra.mxu0 0.0
        %1077 = vmatpush.msra.mxu0 0.0
        %1078 = vmatpush.msra.mxu0 0.0
        %1079 = vmatpush.msra.mxu0 0.0
        %1080 = vmatpush.msra.mxu0 0.0
        %1081 = vmatpush.msra.mxu0 0.0
        %1082 = vmatpush.msra.mxu0 0.0
        %1083 = vmatpush.msra.mxu0 0.0
        %1084 = vmatpush.msra.mxu0 0.0
        %1085 = vmatpush.msra.mxu0 0.0
        %1086 = vmatpush.msra.mxu0 0.0
        %1087 = vmatpush.msra.mxu0 0.0
        %1088 = vmatpush.msra.mxu0 %v1039
        %1089 = vmatpush.msra.mxu0 %v1038
        %1090 = vmatpush.msra.mxu0 %v1037
        %1091 = vmatmul.f32.gmra.mxu0 %v1073
        %v1092 = vpop.f32.mrf.mxu0
        %v1093 = vadd.f32 %v1070, %v1092
        %1094 = vdwg.mxu0
        %s1095 = scalar_lea.vmem [#allocation4], 4
        %v1096 = vld [vmem:[%s1095] ss:$2 sm:$0xf]
        %s1097 = scalar_lea.vmem [#allocation4], 5
        %v1098 = vld [vmem:[%s1097] ss:$2 sm:$0xf]
        %v1099 = vmax.f32 %v1096, %v1098
        %s1100 = scalar_lea.vmem %s7, 48
        %v1101 = vld [vmem:[%s1100] sm:$0xff]
        %v1102 = vld [vmem:[%s1100 + $0x8] sm:$0xff]
        %v1103 = vld [vmem:[%s1100 + $0x10] sm:$0xff]
        %v1105 = vsel %vm1029, %v1099, 0
        %1107 = vmatpush.msra.mxu0 0.0
        %1108 = vmatpush.msra.mxu0 0.0
        %1109 = vmatpush.msra.mxu0 0.0
        %1110 = vmatpush.msra.mxu0 0.0
        %1111 = vmatpush.msra.mxu0 0.0
        %1112 = vmatpush.msra.mxu0 0.0
        %1113 = vmatpush.msra.mxu0 0.0
        %1114 = vmatpush.msra.mxu0 0.0
        %1115 = vmatpush.msra.mxu0 0.0
        %1116 = vmatpush.msra.mxu0 0.0
        %1117 = vmatpush.msra.mxu0 0.0
        %1118 = vmatpush.msra.mxu0 0.0
        %1119 = vmatpush.msra.mxu0 0.0
        %1120 = vmatpush.msra.mxu0 %v1103
        %1121 = vmatpush.msra.mxu0 %v1102
        %1122 = vmatpush.msra.mxu0 %v1101
        %1123 = vmatmul.f32.gmra.mxu0 %v1105
        %v1124 = vpop.f32.mrf.mxu0
        %v1125 = vadd.f32 0.0, %v1124
        %1126 = vdwg.mxu0
        %v1127 = vadd.f32 %v1093, %v1125
        %v1128 = vld [vmem:[%s8] sm:$0x1]
        %v1130 = vperm.slane %v1128, 0
        %v1132 = vadd.f32 %v1127, %v1130
        %v1133 = vmax.f32 %v1132, 0.0
        %vm1134 = vcmask 388096
        %1135 = vst.msk [vmem:[#allocation5] sm:$0xf] %vm1134, %v1133
        %v1136 = vld [vmem:[%s10] sm:$0x1]
        %v1137 = vld [vmem:[#allocation5] sm:$0x1]
        %v1138 = vld [vmem:[#allocation5 + $0x1] sm:$0x1]
        %v1139 = vmax.f32 %v1137, %v1138
        %v1140 = vld [vmem:[%s9] sm:$0xff]
        %v1141 = vld [vmem:[%s9 + $0x8] sm:$0xff]
        %v1142 = vld [vmem:[%s9 + $0x10] sm:$0xff]
        %v1143 = vld [vmem:[%s9 + $0x18] sm:$0xff]
        %v1144 = vld [vmem:[%s9 + $0x20] sm:$0xff]
        %v1145 = vld [vmem:[%s9 + $0x28] sm:$0xff]
        %vm1146 = vcmask 392192
        %v1148 = vsel %vm1146, %v1139, 0
        %1150 = vmatpush.msra.mxu0 0.0
        %1151 = vmatpush.msra.mxu0 0.0
        %1152 = vmatpush.msra.mxu0 0.0
        %1153 = vmatpush.msra.mxu0 0.0
        %1154 = vmatpush.msra.mxu0 0.0
        %1155 = vmatpush.msra.mxu0 0.0
        %1156 = vmatpush.msra.mxu0 0.0
        %1157 = vmatpush.msra.mxu0 0.0
        %1158 = vmatpush.msra.mxu0 0.0
        %1159 = vmatpush.msra.mxu0 0.0
        %1160 = vmatpush.msra.mxu0 %v1145
        %1161 = vmatpush.msra.mxu0 %v1144
        %1162 = vmatpush.msra.mxu0 %v1143
        %1163 = vmatpush.msra.mxu0 %v1142
        %1164 = vmatpush.msra.mxu0 %v1141
        %1165 = vmatpush.msra.mxu0 %v1140
        %1166 = vmatmul.f32.gmra.mxu0 %v1148
        %v1167 = vpop.f32.mrf.mxu0
        %v1168 = vadd.f32 0.0, %v1167
        %1169 = vdwg.mxu0
        %v1170 = vadd.f32 %v1136, %v1168
        %v1171 = vld [vmem:[#allocation5 + $0x2] sm:$0x1]
        %v1172 = vld [vmem:[#allocation5 + $0x3] sm:$0x1]
        %v1173 = vmax.f32 %v1171, %v1172
        %s1174 = scalar_lea.vmem %s9, 48
        %v1175 = vld [vmem:[%s1174] sm:$0xff]
        %v1176 = vld [vmem:[%s1174 + $0x8] sm:$0xff]
        %v1177 = vld [vmem:[%s1174 + $0x10] sm:$0xff]
        %v1178 = vld [vmem:[%s1174 + $0x18] sm:$0xff]
        %v1179 = vld [vmem:[%s1174 + $0x20] sm:$0xff]
        %v1180 = vld [vmem:[%s1174 + $0x28] sm:$0xff]
        %v1182 = vsel %vm1146, %v1173, 0
        %1184 = vmatpush.msra.mxu0 0.0
        %1185 = vmatpush.msra.mxu0 0.0
        %1186 = vmatpush.msra.mxu0 0.0
        %1187 = vmatpush.msra.mxu0 0.0
        %1188 = vmatpush.msra.mxu0 0.0
        %1189 = vmatpush.msra.mxu0 0.0
        %1190 = vmatpush.msra.mxu0 0.0
        %1191 = vmatpush.msra.mxu0 0.0
        %1192 = vmatpush.msra.mxu0 0.0
        %1193 = vmatpush.msra.mxu0 0.0
        %1194 = vmatpush.msra.mxu0 %v1180
        %1195 = vmatpush.msra.mxu0 %v1179
        %1196 = vmatpush.msra.mxu0 %v1178
        %1197 = vmatpush.msra.mxu0 %v1177
        %1198 = vmatpush.msra.mxu0 %v1176
        %1199 = vmatpush.msra.mxu0 %v1175
        %1200 = vmatmul.f32.gmra.mxu0 %v1182
        %v1201 = vpop.f32.mrf.mxu0
        %v1202 = vadd.f32 0.0, %v1201
        %1203 = vdwg.mxu0
        %v1204 = vadd.f32 %v1170, %v1202
        %v1205 = vmax.f32 %v1204, 0.0
        %v1206 = vld [vmem:[%s11] sm:$0xff]
        %v1207 = vld [vmem:[%s11 + $0x8] sm:$0xff]
        %v1208 = vld [vmem:[%s11 + $0x10] sm:$0xff]
        %v1209 = vld [vmem:[%s11 + $0x18] sm:$0xff]
        %v1210 = vld [vmem:[%s11 + $0x20] sm:$0xff]
        %v1211 = vld [vmem:[%s11 + $0x28] sm:$0xff]
        %v1212 = vld [vmem:[%s11 + $0x30] sm:$0xff]
        %v1213 = vld [vmem:[%s11 + $0x38] sm:$0xff]
        %v1214 = vld [vmem:[%s11 + $0x40] sm:$0xff]
        %v1215 = vld [vmem:[%s11 + $0x48] sm:$0xff]
        %v1216 = vld [vmem:[%s11 + $0x50] sm:$0xff]
        %v1217 = vld [vmem:[%s11 + $0x58] sm:$0xff]
        %v1218 = vld [vmem:[%s11 + $0x60] sm:$0xff]
        %v1219 = vld [vmem:[%s11 + $0x68] sm:$0xff]
        %v1220 = vld [vmem:[%s11 + $0x70] sm:$0xff]
        %v1221 = vld [vmem:[%s11 + $0x78] sm:$0xff]
        %v1222 = vld [vmem:[%s12] sm:$0x1]
        %1223 = vmatpush.msra.mxu0 %v1221
        %1224 = vmatpush.msra.mxu0 %v1220
        %1225 = vmatpush.msra.mxu0 %v1219
        %1226 = vmatpush.msra.mxu0 %v1218
        %1227 = vmatpush.msra.mxu0 %v1217
        %1228 = vmatpush.msra.mxu0 %v1216
        %1229 = vmatpush.msra.mxu0 %v1215
        %1230 = vmatpush.msra.mxu0 %v1214
        %1231 = vmatpush.msra.mxu0 %v1213
        %1232 = vmatpush.msra.mxu0 %v1212
        %1233 = vmatpush.msra.mxu0 %v1211
        %1234 = vmatpush.msra.mxu0 %v1210
        %1235 = vmatpush.msra.mxu0 %v1209
        %1236 = vmatpush.msra.mxu0 %v1208
        %1237 = vmatpush.msra.mxu0 %v1207
        %1238 = vmatpush.msra.mxu0 %v1206
        %1239 = vmatmul.f32.gmra.mxu0 %v1205
        %v1240 = vpop.f32.mrf.mxu0
        %v1241 = vadd.f32 %v1222, %v1240
        %1242 = vdwg.mxu0
        %vm1243 = vcmask 65536
        %1244 = vst.msk [vmem:[%s432] sm:$0x1] %vm1243, %v1241
        %s1245 = sand.u32 %s313, 1
        %s1246 = scalar_lea.sflag [#allocation7], %s1245
        %s1247 = sand.u32 %s313, 1
        %s1248 = scalar_lea.vmem [#allocation6], %s1247
        // Predicated region
        $region73: #{cnn_1d_forward.1} parent=71 // pred_check
          %p1249 = pneg %p323
        $region74: #{cnn_1d_forward.1} parent=71 // pred_check_branch
          %1251 = sbr.rel (%p1249) target = $region76
        $region75: #{cnn_1d_forward.1} parent=71 // pred_region
          %1253 = vsyncadd %s1246, 0
          %s1254 = scalar_lea.hbm %s13, %s27
          %s1256 = sshll.u32 %s1248, 4
          %s1257 = int_to_ptr.vmem [resolvable:$true] %s1256
          %s1258 = sshll.u32 %s1254, 4
          %s1259 = int_to_ptr.hbm [resolvable:$true] %s1258
          %1261 = dma.vmem_to_hbm [thread:$0]  %s1257, 16, %s1259, %s1246
        $region76: #{cnn_1d_forward.1} parent=71 // pred_fallthru
          _
      $region72: #{cnn_1d_forward.1} parent=5 // pred_fallthru
        _
      %p1262 = scmp.le.s32.totalorder 2, %s22
      // Predicated region
      $region77: #{cnn_1d_forward.1} parent=5 // pred_check
        %p1263 = pneg %p1262
      $region78: #{cnn_1d_forward.1} parent=5 // pred_check_branch
        %1265 = sbr.rel (%p1263) target = $region80
      $region79: #{cnn_1d_forward.1} parent=5 // pred_region
        %s1266 = ssub.s32 %s22, 2
        // Predicated region
        $region81: #{cnn_1d_forward.1} parent=79 // pred_check
          %p1267 = pneg %p329
        $region82: #{cnn_1d_forward.1} parent=79 // pred_check_branch
          %1269 = sbr.rel (%p1267) target = $region84
        $region83: #{cnn_1d_forward.1} parent=79 // pred_region
          %s1270 = sand.u32 %s314, 1
          %s1271 = scalar_lea.sflag [#allocation7], %s1270
          %s1272 = sand.u32 %s314, 1
          %s1273 = scalar_lea.vmem [#allocation6], %s1272
          %1275 = dma.done %s1271, 16
        $region84: #{cnn_1d_forward.1} parent=79 // pred_fallthru
          _
      $region80: #{cnn_1d_forward.1} parent=5 // pred_fallthru
        _
    $region6: #{cnn_1d_forward.1} parent=1 // loop_footer
      %s26 = sadd.s32 1, %s22
    $region7: #{cnn_1d_forward.1} parent=1 // loop_footer_branch
      %21 = sbr.rel target = $region3
    $region8: #{cnn_1d_forward.1} parent=1 // loop_exit
      _
    %1276 = vsyncpa [#allocation7], 1
    %s1277 = scalar_lea.sflag [#allocation7], 1
    %1278 = vsyncpa %s1277, 1

</llo_original>
